<compile_context>
chip_gen: v7x
topology: tpu7x:2x2x1
jax: 0.10.0
libtpu: 0.0.40
codegen_flags: <defaults>
</compile_context>

<pallas_src>
from math import sqrt

import jax
import jax.numpy as jnp
from jax.experimental import pallas as pl
from jax.experimental.pallas import tpu as pltpu


# ----------------------------------------------------------------------------
# Kernel
# ----------------------------------------------------------------------------
def _make_kernel(norm_fact, bm, L, N, Dp, compute_dtype):
    """One grid step processes `bm` batch elements of the image batch."""

    def kernel(cap_ref, img_ref, wqT_ref, bq_ref, wkT_ref, bk_ref,
               wvT_ref, bv_ref, out_ref):
        f32 = jnp.float32

        # ---- Q projection: once per grid step.  The torch repeat() over the
        #      batch is a broadcast that is never materialized. ---------------
        q = jnp.dot(cap_ref[...], wqT_ref[...], preferred_element_type=f32)
        q = (q + bq_ref[...]).astype(compute_dtype)                   # (L, Dp)

        # ---- K / V projections: two big lane-dense MXU matmuls over the
        #      flattened (bm*N, Dp) image rows (free relabel when N % 8 == 0).
        #      (Fusing into one (Dp, 2Dp) matmul is only worthwhile when the
        #      lane slice at offset Dp is 128-aligned; kept separate here.) ----
        img2d = img_ref[...].reshape(bm * N, Dp)
        k2d = (jnp.dot(img2d, wkT_ref[...], preferred_element_type=f32)
               + bk_ref[...]).astype(compute_dtype)                   # (bm*N, Dp)
        v2d = (jnp.dot(img2d, wvT_ref[...], preferred_element_type=f32)
               + bv_ref[...]).astype(compute_dtype)                   # (bm*N, Dp)

        # ---- Attention scores for ALL batch rows in ONE MXU push:
        #      (bm*N, Dp) contracted with (L, Dp) over Dp -> (bm*N, L). --------
        s = jax.lax.dot_general(k2d, q, (((1,), (1,)), ((), ())),
                                preferred_element_type=f32)           # (bm*N, L)
        s = s.reshape(bm, N, L)              # free relabel when N % 8 == 0
        s = jnp.swapaxes(s, 1, 2)            # (bm, L, N) minor-dim swap

        # ---- Softmax over regions; 1/sqrt(D) applied AFTER softmax, exactly
        #      like the PyTorch module.  Exact reciprocal (denominator tiny). --
        m = jnp.max(s, axis=-1, keepdims=True)
        e = jnp.exp(s - m)
        denom = jnp.sum(e, axis=-1, keepdims=True)                    # (bm, L, 1)
        a = e * (pl.reciprocal(denom, approx=False) * norm_fact)      # (bm, L, N)

        # ---- Output: atten @ V (standard batched 'bqk,bkd->bqd' form). ------
        v3 = v2d.reshape(bm, N, Dp)          # free relabel when N % 8 == 0
        out = jnp.einsum("bln,bnd->bld", a.astype(compute_dtype), v3,
                         preferred_element_type=f32)                  # (bm, L, Dp)
        out_ref[...] = out.astype(out_ref.dtype)

    return kernel


# ----------------------------------------------------------------------------
# Wrapper
# ----------------------------------------------------------------------------
def _pad_last(x, target):
    d = x.shape[-1]
    if d == target:
        return x
    pad = [(0, 0)] * (x.ndim - 1) + [(0, target - d)]
    return jnp.pad(x, pad)


def _pad_square(w, target):
    if w.shape == (target, target):
        return w
    return jnp.pad(w, ((0, target - w.shape[0]), (0, target - w.shape[1])))


def cross_attentioni2t_single_pallas(cap_emb, img_emb, params, *, bm=None,
                                     compute_dtype=jnp.bfloat16):
    """cap_emb: (L, D); img_emb: (B, N, D); returns (B, L, D) float32."""
    B, N, D = img_emb.shape
    L, Dc = cap_emb.shape
    assert Dc == D
    if bm is None:
        # One grid step: right for single-TC v5e / v6e at small/medium B.
        # TODO(synk): on v7x pass bm <= B // 2 so the "parallel" batch grid
        # shards across both TensorCores.
        bm = B
    assert B % bm == 0, "bm must divide the image batch"
    steps = B // bm
    norm_fact = 1.0 / sqrt(D)          # uses ORIGINAL embed dim (torch semantics)

    # Lane padding so every matmul / store is 128-lane dense.  Padded lanes are
    # zero -> the math is exact; the wrapper slices them off at the end.
    Dp = max(128, ((D + 127) // 128) * 128)
    cdt = compute_dtype

    cap_p = _pad_last(cap_emb, Dp).astype(cdt)                        # (L, Dp)
    img_p = _pad_last(img_emb, Dp).astype(cdt)                        # (B, N, Dp)
    wqT_p = _pad_square(params["wq"].T, Dp).astype(cdt)               # (Dp, Dp)
    wkT_p = _pad_square(params["wk"].T, Dp).astype(cdt)
    wvT_p = _pad_square(params["wv"].T, Dp).astype(cdt)
    bq_p = _pad_last(params["bq"].reshape(1, D), Dp).astype(jnp.float32)
    bk_p = _pad_last(params["bk"].reshape(1, D), Dp).astype(jnp.float32)
    bv_p = _pad_last(params["bv"].reshape(1, D), Dp).astype(jnp.float32)

    # VMEM budget: resident weights/cap (x2 in case they end up double-buffered)
    # + double-buffered img/out tiles + f32 intermediates, 1.5x headroom,
    # clamped to [32 MiB, 64 MiB] (valid on v7x, raises v5e's 16 MiB default).
    isz = jnp.dtype(cdt).itemsize
    resident = (3 * Dp * Dp + L * Dp) * isz + 3 * Dp * 4
    tiles = 2 * bm * N * Dp * isz + 2 * bm * L * Dp * 4
    interm = (2 * bm * N * Dp + L * Dp + 2 * bm * L * N + bm * L * Dp) * 4
    vmem_limit = int(min(64 << 20, max(32 << 20, (2 * resident + tiles + interm) * 3 // 2)))

    flops = (2 * steps * L * Dp * Dp      # Q projection (per grid step)
             + 4 * B * N * Dp * Dp        # K and V projections
             + 4 * B * L * N * Dp)        # scores + atten@V
    bytes_accessed = (cap_p.nbytes + img_p.nbytes + wqT_p.nbytes + wkT_p.nbytes
                      + wvT_p.nbytes + bq_p.nbytes + bk_p.nbytes + bv_p.nbytes
                      + B * L * Dp * 4)
    cost = pl.CostEstimate(flops=flops, transcendentals=B * L * N,
                           bytes_accessed=bytes_accessed)

    kernel = _make_kernel(norm_fact, bm, L, N, Dp, cdt)

    def build(single_buffer_resident):
        mode = pl.Buffered(1) if (single_buffer_resident and steps > 1) else None

        def const_spec(shape):
            if mode is None:
                return pl.BlockSpec(shape, lambda i: (0, 0))
            return pl.BlockSpec(shape, lambda i: (0, 0), pipeline_mode=mode)

        return pl.pallas_call(
            kernel,
            out_shape=jax.ShapeDtypeStruct((B, L, Dp), jnp.float32),
            grid=(steps,),
            in_specs=[
                const_spec((L, Dp)),                                  # caption
                pl.BlockSpec((bm, N, Dp), lambda i: (i, 0, 0)),       # image tile
                const_spec((Dp, Dp)), const_spec((1, Dp)),            # Wq^T, bq
                const_spec((Dp, Dp)), const_spec((1, Dp)),            # Wk^T, bk
                const_spec((Dp, Dp)), const_spec((1, Dp)),            # Wv^T, bv
            ],
            out_specs=pl.BlockSpec((bm, L, Dp), lambda i: (i, 0, 0)),
            compiler_params=pltpu.CompilerParams(
                dimension_semantics=("parallel",),
                vmem_limit_bytes=vmem_limit),
            cost_estimate=cost,
        )

    args = (cap_p, img_p, wqT_p, bq_p, wkT_p, bk_p, wvT_p, bv_p)
    try:
        out_p = build(True)(*args)
    except Exception:
        # Fallback if this JAX build rejects single-buffered pipeline_mode.
        out_p = build(False)(*args)

    return out_p[..., :D] if Dp != D else out_p


# ----------------------------------------------------------------------------
# Pure-JAX reference (HIGHEST precision scoped here only) and param init
# ----------------------------------------------------------------------------
def cross_attentioni2t_single_ref(cap_emb, img_emb, params):
    """Mirrors the PyTorch forward exactly, in f32 at highest matmul precision."""
    B = img_emb.shape[0]
    D = cap_emb.shape[-1]
    norm_fact = 1.0 / sqrt(D)
    hp = jax.lax.Precision.HIGHEST
    cap3 = jnp.broadcast_to(cap_emb[None], (B,) + cap_emb.shape)       # repeat
    Q = jnp.einsum("bld,ed->ble", cap3, params["wq"], precision=hp) + params["bq"]
    K = jnp.einsum("bnd,ed->bne", img_emb, params["wk"], precision=hp) + params["bk"]
    V = jnp.einsum("bnd,ed->bne", img_emb, params["wv"], precision=hp) + params["bv"]
    s = jnp.einsum("bld,bnd->bln", Q, K, precision=hp)
    a = jax.nn.softmax(s, axis=-1) * norm_fact                         # scale AFTER softmax
    return jnp.einsum("bln,bnd->bld", a, V, precision=hp)


def init_params(key, D):
    """torch.nn.Linear default init: U(-1/sqrt(in), 1/sqrt(in))."""
    ks = jax.random.split(key, 6)
    bound = 1.0 / sqrt(D)
    u = lambda k, shape: jax.random.uniform(k, shape, jnp.float32, -bound, bound)
    return {
        "wq": u(ks[0], (D, D)), "bq": u(ks[1], (D,)),
        "wk": u(ks[2], (D, D)), "bk": u(ks[3], (D,)),
        "wv": u(ks[4], (D, D)), "bv": u(ks[5], (D,)),
    }


if __name__ == "__main__":
    # Small shapes implied by the forward: B image batches, N regions per image,
    # L caption tokens, D = opt.embed_dim.
    B, N, L, D = 2, 16, 8, 32

    root = jax.random.PRNGKey(0)
    k_param, k_cap, k_img = jax.random.split(root, 3)

    params = init_params(k_param, D)
    cap_emb = jax.random.normal(k_cap, (L, D), jnp.float32)
    img_emb = jax.random.normal(k_img, (B, N, D), jnp.float32)

    ref = cross_attentioni2t_single_ref(cap_emb, img_emb, params)

    # f32 compute path, single grid step (v5e/v6e default).
    out_f32 = cross_attentioni2t_single_pallas(
        cap_emb, img_emb, params, compute_dtype=jnp.float32)
    out_f32 = jax.block_until_ready(out_f32)
    assert out_f32.shape == (B, L, D)
    assert jnp.allclose(out_f32, ref, atol=4e-2, rtol=4e-2), "f32 mismatch vs reference"

    # bf16 compute path with a 2-step batch grid (v7x-style: shards across the
    # two TensorCores and exercises the single-buffered resident-weight specs).
    out_bf16 = cross_attentioni2t_single_pallas(
        cap_emb, img_emb, params, compute_dtype=jnp.bfloat16, bm=1)
    out_bf16 = jax.block_until_ready(out_bf16)
    assert out_bf16.shape == (B, L, D)
    assert jnp.allclose(out_bf16, ref, atol=8e-2, rtol=8e-2), "bf16 mismatch vs reference"

    print("KERNEL_OK")
</pallas_src>

<mosaic_0001>
module attributes {stable_mosaic.version = 11 : i64} {
  func.func @kernel(%arg0: i32, %arg1: memref<8x128xf32, #tpu.memory_space<vmem>>, %arg2: memref<2x16x128xf32, #tpu.memory_space<vmem>>, %arg3: memref<128x128xf32, #tpu.memory_space<vmem>>, %arg4: memref<1x128xf32, #tpu.memory_space<vmem>>, %arg5: memref<128x128xf32, #tpu.memory_space<vmem>>, %arg6: memref<1x128xf32, #tpu.memory_space<vmem>>, %arg7: memref<128x128xf32, #tpu.memory_space<vmem>>, %arg8: memref<1x128xf32, #tpu.memory_space<vmem>>, %arg9: memref<2x8x128xf32, #tpu.memory_space<vmem>>) attributes {dimension_semantics = [#tpu.dimension_semantics<parallel>], iteration_bounds = array<i64: 1>, scalar_prefetch = 0 : i64, scratch_operands = 0 : i64, tpu.core_type = #tpu.core_type<tc>, window_params = [{pipeline_mode = #tpu.pipeline_mode<synchronous>, transform_indices = @transform_0, window_bounds = array<i64: 8, 128>}, {transform_indices = @transform_1, window_bounds = array<i64: 2, 16, 128>}, {pipeline_mode = #tpu.pipeline_mode<synchronous>, transform_indices = @transform_2, window_bounds = array<i64: 128, 128>}, {pipeline_mode = #tpu.pipeline_mode<synchronous>, transform_indices = @transform_3, window_bounds = array<i64: 1, 128>}, {pipeline_mode = #tpu.pipeline_mode<synchronous>, transform_indices = @transform_4, window_bounds = array<i64: 128, 128>}, {pipeline_mode = #tpu.pipeline_mode<synchronous>, transform_indices = @transform_5, window_bounds = array<i64: 1, 128>}, {pipeline_mode = #tpu.pipeline_mode<synchronous>, transform_indices = @transform_6, window_bounds = array<i64: 128, 128>}, {pipeline_mode = #tpu.pipeline_mode<synchronous>, transform_indices = @transform_7, window_bounds = array<i64: 1, 128>}, {transform_indices = @transform_8, window_bounds = array<i64: 2, 8, 128>}]} {
    %c0 = arith.constant 0 : index
    %c0_0 = arith.constant 0 : index
    %0 = vector.load %arg1[%c0, %c0_0] : memref<8x128xf32, #tpu.memory_space<vmem>>, vector<8x128xf32>
    %c0_1 = arith.constant 0 : index
    %c0_2 = arith.constant 0 : index
    %1 = vector.load %arg3[%c0_1, %c0_2] : memref<128x128xf32, #tpu.memory_space<vmem>>, vector<128x128xf32>
    %cst = arith.constant dense<0.000000e+00> : vector<8x128xf32>
    %2 = tpu.matmul %0, %1, %cst {dimension_numbers = #tpu.dot_dimension_numbers<[1], [0], [0], [1], [0, 0, 1, 1], [], []>} : vector<8x128xf32>, vector<128x128xf32>, vector<8x128xf32> -> vector<8x128xf32>
    %c0_3 = arith.constant 0 : index
    %c0_4 = arith.constant 0 : index
    %3 = vector.load %arg4[%c0_3, %c0_4] : memref<1x128xf32, #tpu.memory_space<vmem>>, vector<1x128xf32>
    %4 = vector.broadcast %3 : vector<1x128xf32> to vector<8x128xf32>
    %5 = arith.addf %2, %4 : vector<8x128xf32>
    %c0_5 = arith.constant 0 : index
    %c0_6 = arith.constant 0 : index
    %c0_7 = arith.constant 0 : index
    %6 = vector.load %arg2[%c0_5, %c0_6, %c0_7] : memref<2x16x128xf32, #tpu.memory_space<vmem>>, vector<2x16x128xf32>
    %7 = vector.shape_cast %6 : vector<2x16x128xf32> to vector<32x128xf32>
    %c0_8 = arith.constant 0 : index
    %c0_9 = arith.constant 0 : index
    %8 = vector.load %arg5[%c0_8, %c0_9] : memref<128x128xf32, #tpu.memory_space<vmem>>, vector<128x128xf32>
    %cst_10 = arith.constant dense<0.000000e+00> : vector<32x128xf32>
    %9 = tpu.matmul %7, %8, %cst_10 {dimension_numbers = #tpu.dot_dimension_numbers<[1], [0], [0], [1], [0, 0, 1, 1], [], []>} : vector<32x128xf32>, vector<128x128xf32>, vector<32x128xf32> -> vector<32x128xf32>
    %c0_11 = arith.constant 0 : index
    %c0_12 = arith.constant 0 : index
    %10 = vector.load %arg6[%c0_11, %c0_12] : memref<1x128xf32, #tpu.memory_space<vmem>>, vector<1x128xf32>
    %11 = vector.broadcast %10 : vector<1x128xf32> to vector<32x128xf32>
    %12 = arith.addf %9, %11 : vector<32x128xf32>
    %c0_13 = arith.constant 0 : index
    %c0_14 = arith.constant 0 : index
    %13 = vector.load %arg7[%c0_13, %c0_14] : memref<128x128xf32, #tpu.memory_space<vmem>>, vector<128x128xf32>
    %cst_15 = arith.constant dense<0.000000e+00> : vector<32x128xf32>
    %14 = tpu.matmul %7, %13, %cst_15 {dimension_numbers = #tpu.dot_dimension_numbers<[1], [0], [0], [1], [0, 0, 1, 1], [], []>} : vector<32x128xf32>, vector<128x128xf32>, vector<32x128xf32> -> vector<32x128xf32>
    %c0_16 = arith.constant 0 : index
    %c0_17 = arith.constant 0 : index
    %15 = vector.load %arg8[%c0_16, %c0_17] : memref<1x128xf32, #tpu.memory_space<vmem>>, vector<1x128xf32>
    %16 = vector.broadcast %15 : vector<1x128xf32> to vector<32x128xf32>
    %17 = arith.addf %14, %16 : vector<32x128xf32>
    %cst_18 = arith.constant dense<0.000000e+00> : vector<32x8xf32>
    %18 = tpu.matmul %12, %5, %cst_18 {dimension_numbers = #tpu.dot_dimension_numbers<[1], [1], [0], [0], [0, 0, 1, 0], [], []>} : vector<32x128xf32>, vector<8x128xf32>, vector<32x8xf32> -> vector<32x8xf32>
    %19 = vector.shape_cast %18 : vector<32x8xf32> to vector<2x16x8xf32>
    %20 = tpu.transpose %19, [0, 2, 1] : vector<2x16x8xf32> -> vector<2x8x16xf32>
    %cst_19 = arith.constant dense<0xFF800000> : vector<2x8xf32>
    %21 = vector.multi_reduction <maximumf>, %20, %cst_19 [2] : vector<2x8x16xf32> to vector<2x8xf32>
    %22 = vector.shape_cast %21 : vector<2x8xf32> to vector<2x8x1xf32>
    %23 = vector.broadcast %22 : vector<2x8x1xf32> to vector<2x8x16xf32>
    %24 = arith.subf %20, %23 : vector<2x8x16xf32>
    %25 = math.exp %24 : vector<2x8x16xf32>
    %cst_20 = arith.constant dense<0.000000e+00> : vector<2x8xf32>
    %26 = vector.multi_reduction <add>, %25, %cst_20 [2] : vector<2x8x16xf32> to vector<2x8xf32>
    %27 = vector.shape_cast %26 : vector<2x8xf32> to vector<2x8x1xf32>
    %28 = tpu.reciprocal %27 : vector<2x8x1xf32> -> vector<2x8x1xf32>
    %cst_21 = arith.constant 0.176776692 : f32
    %29 = vector.broadcast %cst_21 : f32 to vector<2x8x1xf32>
    %30 = arith.mulf %28, %29 : vector<2x8x1xf32>
    %31 = vector.broadcast %30 : vector<2x8x1xf32> to vector<2x8x16xf32>
    %32 = arith.mulf %25, %31 : vector<2x8x16xf32>
    %33 = vector.shape_cast %17 : vector<32x128xf32> to vector<2x16x128xf32>
    "tpu.trace_start"() <{level = 10 : i32, message = "bln,bnd->bld"}> : () -> ()
    %cst_22 = arith.constant dense<0.000000e+00> : vector<2x8x128xf32>
    %34 = tpu.matmul %32, %33, %cst_22 {dimension_numbers = #tpu.dot_dimension_numbers<[2], [1], [1], [2], [0, 0, 0, 1, 1, 2], [0], [0]>} : vector<2x8x16xf32>, vector<2x16x128xf32>, vector<2x8x128xf32> -> vector<2x8x128xf32>
    "tpu.trace_stop"() : () -> ()
    %c0_23 = arith.constant 0 : index
    %c0_24 = arith.constant 0 : index
    %c0_25 = arith.constant 0 : index
    %35 = vector.load %arg9[%c0_23, %c0_24, %c0_25] : memref<2x8x128xf32, #tpu.memory_space<vmem>>, vector<2x8x128xf32>
    tpu.vector_store %arg9[%c0_23, %c0_24, %c0_25], %34 {strides = array<i32>} : memref<2x8x128xf32, #tpu.memory_space<vmem>>, vector<2x8x128xf32>,
    return
  }
  func.func @transform_0(%arg0: i32) -> (i32, i32) {
    %c0_i32 = arith.constant 0 : i32
    %c0_i32_0 = arith.constant 0 : i32
    %c0_i32_1 = arith.constant 0 : i32
    return %c0_i32, %c0_i32_0 : i32, i32
  }
  func.func @transform_1(%arg0: i32) -> (i32, i32, i32) {
    %c0_i32 = arith.constant 0 : i32
    %c0_i32_0 = arith.constant 0 : i32
    %c0_i32_1 = arith.constant 0 : i32
    return %arg0, %c0_i32, %c0_i32_0 : i32, i32, i32
  }
  func.func @transform_2(%arg0: i32) -> (i32, i32) {
    %c0_i32 = arith.constant 0 : i32
    %c0_i32_0 = arith.constant 0 : i32
    %c0_i32_1 = arith.constant 0 : i32
    return %c0_i32, %c0_i32_0 : i32, i32
  }
  func.func @transform_3(%arg0: i32) -> (i32, i32) {
    %c0_i32 = arith.constant 0 : i32
    %c0_i32_0 = arith.constant 0 : i32
    %c0_i32_1 = arith.constant 0 : i32
    return %c0_i32, %c0_i32_0 : i32, i32
  }
  func.func @transform_4(%arg0: i32) -> (i32, i32) {
    %c0_i32 = arith.constant 0 : i32
    %c0_i32_0 = arith.constant 0 : i32
    %c0_i32_1 = arith.constant 0 : i32
    return %c0_i32, %c0_i32_0 : i32, i32
  }
  func.func @transform_5(%arg0: i32) -> (i32, i32) {
    %c0_i32 = arith.constant 0 : i32
    %c0_i32_0 = arith.constant 0 : i32
    %c0_i32_1 = arith.constant 0 : i32
    return %c0_i32, %c0_i32_0 : i32, i32
  }
  func.func @transform_6(%arg0: i32) -> (i32, i32) {
    %c0_i32 = arith.constant 0 : i32
    %c0_i32_0 = arith.constant 0 : i32
    %c0_i32_1 = arith.constant 0 : i32
    return %c0_i32, %c0_i32_0 : i32, i32
  }
  func.func @transform_7(%arg0: i32) -> (i32, i32) {
    %c0_i32 = arith.constant 0 : i32
    %c0_i32_0 = arith.constant 0 : i32
    %c0_i32_1 = arith.constant 0 : i32
    return %c0_i32, %c0_i32_0 : i32, i32
  }
  func.func @transform_8(%arg0: i32) -> (i32, i32, i32) {
    %c0_i32 = arith.constant 0 : i32
    %c0_i32_0 = arith.constant 0 : i32
    %c0_i32_1 = arith.constant 0 : i32
    return %arg0, %c0_i32, %c0_i32_0 : i32, i32, i32
  }
}

module attributes {stable_mosaic.version = 11 : i64} {
  func.func @kernel(%arg0: i32, %arg1: memref<8x128xf32, #tpu.memory_space<vmem>>, %arg2: memref<2x16x128xf32, #tpu.memory_space<vmem>>, %arg3: memref<128x128xf32, #tpu.memory_space<vmem>>, %arg4: memref<1x128xf32, #tpu.memory_space<vmem>>, %arg5: memref<128x128xf32, #tpu.memory_space<vmem>>, %arg6: memref<1x128xf32, #tpu.memory_space<vmem>>, %arg7: memref<128x128xf32, #tpu.memory_space<vmem>>, %arg8: memref<1x128xf32, #tpu.memory_space<vmem>>, %arg9: memref<2x8x128xf32, #tpu.memory_space<vmem>>) attributes {dimension_semantics = [#tpu.dimension_semantics<parallel>], iteration_bounds = array<i64: 1>, scalar_prefetch = 0 : i64, scratch_operands = 0 : i64, tpu.core_type = #tpu.core_type<tc>, window_params = [{pipeline_mode = #tpu.pipeline_mode<synchronous>, transform_indices = @transform_0, window_bounds = array<i64: 8, 128>}, {transform_indices = @transform_1, window_bounds = array<i64: 2, 16, 128>}, {pipeline_mode = #tpu.pipeline_mode<synchronous>, transform_indices = @transform_2, window_bounds = array<i64: 128, 128>}, {pipeline_mode = #tpu.pipeline_mode<synchronous>, transform_indices = @transform_3, window_bounds = array<i64: 1, 128>}, {pipeline_mode = #tpu.pipeline_mode<synchronous>, transform_indices = @transform_4, window_bounds = array<i64: 128, 128>}, {pipeline_mode = #tpu.pipeline_mode<synchronous>, transform_indices = @transform_5, window_bounds = array<i64: 1, 128>}, {pipeline_mode = #tpu.pipeline_mode<synchronous>, transform_indices = @transform_6, window_bounds = array<i64: 128, 128>}, {pipeline_mode = #tpu.pipeline_mode<synchronous>, transform_indices = @transform_7, window_bounds = array<i64: 1, 128>}, {transform_indices = @transform_8, window_bounds = array<i64: 2, 8, 128>}]} {
    %c0 = arith.constant 0 : index
    %c0_0 = arith.constant 0 : index
    %0 = vector.load %arg1[%c0, %c0_0] : memref<8x128xf32, #tpu.memory_space<vmem>>, vector<8x128xf32>
    %c0_1 = arith.constant 0 : index
    %c0_2 = arith.constant 0 : index
    %1 = vector.load %arg3[%c0_1, %c0_2] : memref<128x128xf32, #tpu.memory_space<vmem>>, vector<128x128xf32>
    %cst = arith.constant dense<0.000000e+00> : vector<8x128xf32>
    %2 = tpu.matmul %0, %1, %cst {dimension_numbers = #tpu.dot_dimension_numbers<[1], [0], [0], [1], [0, 0, 1, 1], [], []>} : vector<8x128xf32>, vector<128x128xf32>, vector<8x128xf32> -> vector<8x128xf32>
    %c0_3 = arith.constant 0 : index
    %c0_4 = arith.constant 0 : index
    %3 = vector.load %arg4[%c0_3, %c0_4] : memref<1x128xf32, #tpu.memory_space<vmem>>, vector<1x128xf32>
    %4 = vector.broadcast %3 : vector<1x128xf32> to vector<8x128xf32>
    %5 = arith.addf %2, %4 : vector<8x128xf32>
    %c0_5 = arith.constant 0 : index
    %c0_6 = arith.constant 0 : index
    %c0_7 = arith.constant 0 : index
    %6 = vector.load %arg2[%c0_5, %c0_6, %c0_7] : memref<2x16x128xf32, #tpu.memory_space<vmem>>, vector<2x16x128xf32>
    %7 = vector.shape_cast %6 : vector<2x16x128xf32> to vector<32x128xf32>
    %c0_8 = arith.constant 0 : index
    %c0_9 = arith.constant 0 : index
    %8 = vector.load %arg5[%c0_8, %c0_9] : memref<128x128xf32, #tpu.memory_space<vmem>>, vector<128x128xf32>
    %cst_10 = arith.constant dense<0.000000e+00> : vector<32x128xf32>
    %9 = tpu.matmul %7, %8, %cst_10 {dimension_numbers = #tpu.dot_dimension_numbers<[1], [0], [0], [1], [0, 0, 1, 1], [], []>} : vector<32x128xf32>, vector<128x128xf32>, vector<32x128xf32> -> vector<32x128xf32>
    %c0_11 = arith.constant 0 : index
    %c0_12 = arith.constant 0 : index
    %10 = vector.load %arg6[%c0_11, %c0_12] : memref<1x128xf32, #tpu.memory_space<vmem>>, vector<1x128xf32>
    %11 = vector.broadcast %10 : vector<1x128xf32> to vector<32x128xf32>
    %12 = arith.addf %9, %11 : vector<32x128xf32>
    %c0_13 = arith.constant 0 : index
    %c0_14 = arith.constant 0 : index
    %13 = vector.load %arg7[%c0_13, %c0_14] : memref<128x128xf32, #tpu.memory_space<vmem>>, vector<128x128xf32>
    %cst_15 = arith.constant dense<0.000000e+00> : vector<32x128xf32>
    %14 = tpu.matmul %7, %13, %cst_15 {dimension_numbers = #tpu.dot_dimension_numbers<[1], [0], [0], [1], [0, 0, 1, 1], [], []>} : vector<32x128xf32>, vector<128x128xf32>, vector<32x128xf32> -> vector<32x128xf32>
    %c0_16 = arith.constant 0 : index
    %c0_17 = arith.constant 0 : index
    %15 = vector.load %arg8[%c0_16, %c0_17] : memref<1x128xf32, #tpu.memory_space<vmem>>, vector<1x128xf32>
    %16 = vector.broadcast %15 : vector<1x128xf32> to vector<32x128xf32>
    %17 = arith.addf %14, %16 : vector<32x128xf32>
    %cst_18 = arith.constant dense<0.000000e+00> : vector<32x8xf32>
    %18 = tpu.matmul %12, %5, %cst_18 {dimension_numbers = #tpu.dot_dimension_numbers<[1], [1], [0], [0], [0, 0, 1, 0], [], []>} : vector<32x128xf32>, vector<8x128xf32>, vector<32x8xf32> -> vector<32x8xf32>
    %19 = vector.shape_cast %18 : vector<32x8xf32> to vector<2x16x8xf32>
    %20 = tpu.transpose %19, [0, 2, 1] : vector<2x16x8xf32> -> vector<2x8x16xf32>
    %cst_19 = arith.constant dense<0xFF800000> : vector<2x8xf32>
    %21 = vector.multi_reduction <maximumf>, %20, %cst_19 [2] : vector<2x8x16xf32> to vector<2x8xf32>
    %22 = vector.shape_cast %21 : vector<2x8xf32> to vector<2x8x1xf32>
    %23 = vector.broadcast %22 : vector<2x8x1xf32> to vector<2x8x16xf32>
    %24 = arith.subf %20, %23 : vector<2x8x16xf32>
    %25 = math.exp %24 : vector<2x8x16xf32>
    %cst_20 = arith.constant dense<0.000000e+00> : vector<2x8xf32>
    %26 = vector.multi_reduction <add>, %25, %cst_20 [2] : vector<2x8x16xf32> to vector<2x8xf32>
    %27 = vector.shape_cast %26 : vector<2x8xf32> to vector<2x8x1xf32>
    %28 = tpu.reciprocal %27 : vector<2x8x1xf32> -> vector<2x8x1xf32>
    %cst_21 = arith.constant 0.176776692 : f32
    %29 = vector.broadcast %cst_21 : f32 to vector<2x8x1xf32>
    %30 = arith.mulf %28, %29 : vector<2x8x1xf32>
    %31 = vector.broadcast %30 : vector<2x8x1xf32> to vector<2x8x16xf32>
    %32 = arith.mulf %25, %31 : vector<2x8x16xf32>
    %33 = vector.shape_cast %17 : vector<32x128xf32> to vector<2x16x128xf32>
    "tpu.trace_start"() <{level = 10 : i32, message = "bln,bnd->bld"}> : () -> ()
    %cst_22 = arith.constant dense<0.000000e+00> : vector<2x8x128xf32>
    %34 = tpu.matmul %32, %33, %cst_22 {dimension_numbers = #tpu.dot_dimension_numbers<[2], [1], [1], [2], [0, 0, 0, 1, 1, 2], [0], [0]>} : vector<2x8x16xf32>, vector<2x16x128xf32>, vector<2x8x128xf32> -> vector<2x8x128xf32>
    "tpu.trace_stop"() : () -> ()
    %c0_23 = arith.constant 0 : index
    %c0_24 = arith.constant 0 : index
    %c0_25 = arith.constant 0 : index
    %35 = vector.load %arg9[%c0_23, %c0_24, %c0_25] : memref<2x8x128xf32, #tpu.memory_space<vmem>>, vector<2x8x128xf32>
    tpu.vector_store %arg9[%c0_23, %c0_24, %c0_25], %34 {strides = array<i32>} : memref<2x8x128xf32, #tpu.memory_space<vmem>>, vector<2x8x128xf32>,
    return
  }
  func.func @transform_0(%arg0: i32) -> (i32, i32) {
    %c0_i32 = arith.constant 0 : i32
    %c0_i32_0 = arith.constant 0 : i32
    %c0_i32_1 = arith.constant 0 : i32
    return %c0_i32, %c0_i32_0 : i32, i32
  }
  func.func @transform_1(%arg0: i32) -> (i32, i32, i32) {
    %c0_i32 = arith.constant 0 : i32
    %c0_i32_0 = arith.constant 0 : i32
    %c0_i32_1 = arith.constant 0 : i32
    return %arg0, %c0_i32, %c0_i32_0 : i32, i32, i32
  }
  func.func @transform_2(%arg0: i32) -> (i32, i32) {
    %c0_i32 = arith.constant 0 : i32
    %c0_i32_0 = arith.constant 0 : i32
    %c0_i32_1 = arith.constant 0 : i32
    return %c0_i32, %c0_i32_0 : i32, i32
  }
  func.func @transform_3(%arg0: i32) -> (i32, i32) {
    %c0_i32 = arith.constant 0 : i32
    %c0_i32_0 = arith.constant 0 : i32
    %c0_i32_1 = arith.constant 0 : i32
    return %c0_i32, %c0_i32_0 : i32, i32
  }
  func.func @transform_4(%arg0: i32) -> (i32, i32) {
    %c0_i32 = arith.constant 0 : i32
    %c0_i32_0 = arith.constant 0 : i32
    %c0_i32_1 = arith.constant 0 : i32
    return %c0_i32, %c0_i32_0 : i32, i32
  }
  func.func @transform_5(%arg0: i32) -> (i32, i32) {
    %c0_i32 = arith.constant 0 : i32
    %c0_i32_0 = arith.constant 0 : i32
    %c0_i32_1 = arith.constant 0 : i32
    return %c0_i32, %c0_i32_0 : i32, i32
  }
  func.func @transform_6(%arg0: i32) -> (i32, i32) {
    %c0_i32 = arith.constant 0 : i32
    %c0_i32_0 = arith.constant 0 : i32
    %c0_i32_1 = arith.constant 0 : i32
    return %c0_i32, %c0_i32_0 : i32, i32
  }
  func.func @transform_7(%arg0: i32) -> (i32, i32) {
    %c0_i32 = arith.constant 0 : i32
    %c0_i32_0 = arith.constant 0 : i32
    %c0_i32_1 = arith.constant 0 : i32
    return %c0_i32, %c0_i32_0 : i32, i32
  }
  func.func @transform_8(%arg0: i32) -> (i32, i32, i32) {
    %c0_i32 = arith.constant 0 : i32
    %c0_i32_0 = arith.constant 0 : i32
    %c0_i32_1 = arith.constant 0 : i32
    return %arg0, %c0_i32, %c0_i32_0 : i32, i32, i32
  }
}

</mosaic_0001>

<llo_original>
// kernel: tpu_custom_call.1
$region0: #{tpu_custom_call.1}
  #allocation0 [shape = 'u32[]', space=smem, size = 0x4, offset = 0x4, fixed_abs, tag = 'smem constant byte address 0x4 - core index']
  #allocation1 [shape = 'u32[144,128]{1,0:T(1,128)}', space=vmem, size = 0x12000, scoped, tag = 'internal scratch']
  %s0 = inlined_call_operand.hbm [shape: f32[8,128], index: 0, kind: input, shape index: {}]
  %s1 = inlined_call_operand.hbm [shape: f32[2,16,128], index: 1, kind: input, shape index: {}]
  %s2 = inlined_call_operand.hbm [shape: f32[128,128], index: 2, kind: input, shape index: {}]
  %s3 = inlined_call_operand.vmem [shape: f32[1,128], index: 3, kind: input, shape index: {}]
  %s4 = inlined_call_operand.hbm [shape: f32[128,128], index: 4, kind: input, shape index: {}]
  %s5 = inlined_call_operand.vmem [shape: f32[1,128], index: 5, kind: input, shape index: {}]
  %s6 = inlined_call_operand.hbm [shape: f32[128,128], index: 6, kind: input, shape index: {}]
  %s7 = inlined_call_operand.vmem [shape: f32[1,128], index: 7, kind: input, shape index: {}]
  %s8 = inlined_call_operand.hbm [shape: f32[2,8,128], index: 8, kind: output, shape index: {}]
  %s9 = sld [smem:[#allocation0]]
  $region62: #{tpu_custom_call.1} parent=0
    _
  %s11 = ssub.s32 1, %s9
  %s12 = scalar_select 0, %s11, %s9
  $region1: #{tpu_custom_call.1} parent=0
    #allocation2 [shape = 'u8[4096]{0}', space=vmem, size = 0x1000, scoped, tag = 'input window, operand 0, single buffered']
    #allocation3 [shape = 's32[1]{0}', space=sflag, size = 0x4, scoped, tag = 'scoped memory for tpu_custom_call.1']
    #allocation4 [shape = 's32[1]{0}', space=sflag, size = 0x4, scoped, tag = 'scoped memory for tpu_custom_call.1']
    #allocation5 [shape = 'u8[16384]{0}', space=vmem, size = 0x4000, scoped, tag = 'input window, operand 1, single buffered']
    #allocation6 [shape = 's32[1]{0}', space=sflag, size = 0x4, scoped, tag = 'scoped memory for tpu_custom_call.1']
    #allocation7 [shape = 'u8[65536]{0}', space=vmem, size = 0x10000, scoped, tag = 'input window, operand 2, single buffered']
    #allocation8 [shape = 'u8[65536]{0}', space=vmem, size = 0x10000, scoped, tag = 'input window, operand 4, single buffered']
    #allocation9 [shape = 's32[1]{0}', space=sflag, size = 0x4, scoped, tag = 'scoped memory for tpu_custom_call.1']
    #allocation10 [shape = 'u8[65536]{0}', space=vmem, size = 0x10000, scoped, tag = 'input window, operand 6, single buffered']
    #allocation11 [shape = 'u8[8192]{0}', space=vmem, size = 0x2000, scoped, tag = 'output window, operand 0, single buffered']
    %13 = vsyncpa [#allocation3], 0
    %14 = vsyncpa [#allocation6], 0
    %15 = vsyncpa [#allocation9], 0
    %16 = vsyncpa [#allocation4], 0
    // Predicated region
    $region2: #{tpu_custom_call.1} parent=1 // pred_check
      _
    $region3: #{tpu_custom_call.1} parent=1 // pred_check_branch
      %18 = sbr.rel (0) target = $region5
    $region4: #{tpu_custom_call.1} parent=1 // pred_region
      %s20 = ssub.s32 128, 128
      %21 = vsyncadd [#allocation3], %s20
      %s23 = sshll.u32 [#allocation2], 4
      %s24 = int_to_ptr.vmem [resolvable:$true] %s23
      %26 = dma.hbm_to_vmem [thread:$0]  %s0, 128, %s24, [#allocation3]
    $region5: #{tpu_custom_call.1} parent=1 // pred_fallthru
      _
    // Predicated region
    $region6: #{tpu_custom_call.1} parent=1 // pred_check
      _
    $region7: #{tpu_custom_call.1} parent=1 // pred_check_branch
      %28 = sbr.rel (0) target = $region9
    $region8: #{tpu_custom_call.1} parent=1 // pred_region
      %s30 = ssub.s32 512, 512
      %31 = vsyncadd [#allocation6], %s30
      %s32 = sshll.u32 [#allocation5], 4
      %s33 = int_to_ptr.vmem [resolvable:$true] %s32
      %38 = dma.hbm_to_vmem [thread:$0]  %s1, 512, %s33, [#allocation6], 128, 128, 8
    $region9: #{tpu_custom_call.1} parent=1 // pred_fallthru
      _
    // Predicated region
    $region10: #{tpu_custom_call.1} parent=1 // pred_check
      _
    $region11: #{tpu_custom_call.1} parent=1 // pred_check_branch
      %40 = sbr.rel (0) target = $region13
    $region12: #{tpu_custom_call.1} parent=1 // pred_region
      %s42 = ssub.s32 2048, 2048
      %43 = vsyncadd [#allocation6], %s42
      %s44 = sshll.u32 [#allocation7], 4
      %s45 = int_to_ptr.vmem [resolvable:$true] %s44
      %50 = dma.hbm_to_vmem [thread:$0]  %s2, 2048, %s45, [#allocation6], 128, 128, 8
    $region13: #{tpu_custom_call.1} parent=1 // pred_fallthru
      _
    // Predicated region
    $region14: #{tpu_custom_call.1} parent=1 // pred_check
      _
    $region15: #{tpu_custom_call.1} parent=1 // pred_check_branch
      %52 = sbr.rel (0) target = $region17
    $region16: #{tpu_custom_call.1} parent=1 // pred_region
      _
    $region17: #{tpu_custom_call.1} parent=1 // pred_fallthru
      _
    // Predicated region
    $region18: #{tpu_custom_call.1} parent=1 // pred_check
      _
    $region19: #{tpu_custom_call.1} parent=1 // pred_check_branch
      %54 = sbr.rel (0) target = $region21
    $region20: #{tpu_custom_call.1} parent=1 // pred_region
      %s56 = ssub.s32 2048, 2048
      %57 = vsyncadd [#allocation9], %s56
      %s58 = sshll.u32 [#allocation8], 4
      %s59 = int_to_ptr.vmem [resolvable:$true] %s58
      %64 = dma.hbm_to_vmem [thread:$0]  %s4, 2048, %s59, [#allocation9], 128, 128, 8
    $region21: #{tpu_custom_call.1} parent=1 // pred_fallthru
      _
    // Predicated region
    $region22: #{tpu_custom_call.1} parent=1 // pred_check
      _
    $region23: #{tpu_custom_call.1} parent=1 // pred_check_branch
      %66 = sbr.rel (0) target = $region25
    $region24: #{tpu_custom_call.1} parent=1 // pred_region
      _
    $region25: #{tpu_custom_call.1} parent=1 // pred_fallthru
      _
    // Predicated region
    $region26: #{tpu_custom_call.1} parent=1 // pred_check
      _
    $region27: #{tpu_custom_call.1} parent=1 // pred_check_branch
      %68 = sbr.rel (0) target = $region29
    $region28: #{tpu_custom_call.1} parent=1 // pred_region
      %s70 = ssub.s32 2048, 2048
      %71 = vsyncadd [#allocation9], %s70
      %s72 = sshll.u32 [#allocation10], 4
      %s73 = int_to_ptr.vmem [resolvable:$true] %s72
      %78 = dma.hbm_to_vmem [thread:$0]  %s6, 2048, %s73, [#allocation9], 128, 128, 8
    $region29: #{tpu_custom_call.1} parent=1 // pred_fallthru
      _
    // Predicated region
    $region30: #{tpu_custom_call.1} parent=1 // pred_check
      _
    $region31: #{tpu_custom_call.1} parent=1 // pred_check_branch
      %80 = sbr.rel (0) target = $region33
    $region32: #{tpu_custom_call.1} parent=1 // pred_region
      _
    $region33: #{tpu_custom_call.1} parent=1 // pred_fallthru
      _
    // Predicated region
    $region34: #{tpu_custom_call.1} parent=1 // pred_check
      _
    $region35: #{tpu_custom_call.1} parent=1 // pred_check_branch
      %82 = sbr.rel (0) target = $region37
    $region36: #{tpu_custom_call.1} parent=1 // pred_region
      %83 = dma.done [#allocation3], 128
    $region37: #{tpu_custom_call.1} parent=1 // pred_fallthru
      _
    // Predicated region
    $region38: #{tpu_custom_call.1} parent=1 // pred_check
      _
    $region39: #{tpu_custom_call.1} parent=1 // pred_check_branch
      %85 = sbr.rel (0) target = $region41
    $region40: #{tpu_custom_call.1} parent=1 // pred_region
      %86 = dma.done [#allocation6], 512
    $region41: #{tpu_custom_call.1} parent=1 // pred_fallthru
      _
    // Predicated region
    $region42: #{tpu_custom_call.1} parent=1 // pred_check
      _
    $region43: #{tpu_custom_call.1} parent=1 // pred_check_branch
      %88 = sbr.rel (0) target = $region45
    $region44: #{tpu_custom_call.1} parent=1 // pred_region
      %89 = dma.done [#allocation6], 2048
    $region45: #{tpu_custom_call.1} parent=1 // pred_fallthru
      _
    // Predicated region
    $region46: #{tpu_custom_call.1} parent=1 // pred_check
      _
    $region47: #{tpu_custom_call.1} parent=1 // pred_check_branch
      %91 = sbr.rel (0) target = $region49
    $region48: #{tpu_custom_call.1} parent=1 // pred_region
      %92 = dma.done [#allocation9], 2048
    $region49: #{tpu_custom_call.1} parent=1 // pred_fallthru
      _
    // Predicated region
    $region50: #{tpu_custom_call.1} parent=1 // pred_check
      _
    $region51: #{tpu_custom_call.1} parent=1 // pred_check_branch
      %94 = sbr.rel (0) target = $region53
    $region52: #{tpu_custom_call.1} parent=1 // pred_region
      %95 = dma.done [#allocation9], 2048
    $region53: #{tpu_custom_call.1} parent=1 // pred_fallthru
      _
    %v96 = vld [vmem:[#allocation2] sm:$0xff]
    %v97 = vld [vmem:[#allocation7] sm:$0xff]
    %v98 = vld [vmem:[#allocation7 + $0x8] sm:$0xff]
    %v99 = vld [vmem:[#allocation7 + $0x10] sm:$0xff]
    %v100 = vld [vmem:[#allocation7 + $0x18] sm:$0xff]
    %v101 = vld [vmem:[#allocation7 + $0x20] sm:$0xff]
    %v102 = vld [vmem:[#allocation7 + $0x28] sm:$0xff]
    %v103 = vld [vmem:[#allocation7 + $0x30] sm:$0xff]
    %v104 = vld [vmem:[#allocation7 + $0x38] sm:$0xff]
    %v105 = vld [vmem:[#allocation7 + $0x40] sm:$0xff]
    %v106 = vld [vmem:[#allocation7 + $0x48] sm:$0xff]
    %v107 = vld [vmem:[#allocation7 + $0x50] sm:$0xff]
    %v108 = vld [vmem:[#allocation7 + $0x58] sm:$0xff]
    %v109 = vld [vmem:[#allocation7 + $0x60] sm:$0xff]
    %v110 = vld [vmem:[#allocation7 + $0x68] sm:$0xff]
    %v111 = vld [vmem:[#allocation7 + $0x70] sm:$0xff]
    %v112 = vld [vmem:[#allocation7 + $0x78] sm:$0xff]
    %v113 = vld [vmem:[%s3] sm:$0x1]
    %v115 = vlaneseq
    %v116 = vshrl.u32 %v115, 7
    %v117 = vsub.s32 0, %v116
    %v118 = vrot.slane %v113, %v117
    %120 = vmatprep.subr.mxu0 0.0
    %121 = vmatpush1.msra.mxu0 %v97
    %122 = vmatprep.subr.mxu0 0.0
    %123 = vmatpush1.msra.mxu0 %v98
    %124 = vmatprep.subr.mxu0 0.0
    %125 = vmatpush1.msra.mxu0 %v99
    %126 = vmatprep.subr.mxu0 0.0
    %127 = vmatpush1.msra.mxu0 %v100
    %128 = vmatprep.subr.mxu0 0.0
    %129 = vmatpush1.msra.mxu0 %v101
    %130 = vmatprep.subr.mxu0 0.0
    %131 = vmatpush1.msra.mxu0 %v102
    %132 = vmatprep.subr.mxu0 0.0
    %133 = vmatpush1.msra.mxu0 %v103
    %134 = vmatprep.subr.mxu0 0.0
    %135 = vmatpush1.msra.mxu0 %v104
    %136 = vmatprep.subr.mxu0 0.0
    %137 = vmatpush1.msra.mxu0 %v105
    %138 = vmatprep.subr.mxu0 0.0
    %139 = vmatpush1.msra.mxu0 %v106
    %140 = vmatprep.subr.mxu0 0.0
    %141 = vmatpush1.msra.mxu0 %v107
    %142 = vmatprep.subr.mxu0 0.0
    %143 = vmatpush1.msra.mxu0 %v108
    %144 = vmatprep.subr.mxu0 0.0
    %145 = vmatpush1.msra.mxu0 %v109
    %146 = vmatprep.subr.mxu0 0.0
    %147 = vmatpush1.msra.mxu0 %v110
    %148 = vmatprep.subr.mxu0 0.0
    %149 = vmatpush1.msra.mxu0 %v111
    %150 = vmatprep.subr.mxu0 0.0
    %151 = vmatpush1.msra.mxu0 %v112
    %152 = vmatprep.subr.mxu0 0.0
    %153 = vmatpush1.msra.mxu0 0.0
    %154 = vmatprep.subr.mxu0 0.0
    %155 = vmatpush1.msra.mxu0 0.0
    %156 = vmatprep.subr.mxu0 0.0
    %157 = vmatpush1.msra.mxu0 0.0
    %158 = vmatprep.subr.mxu0 0.0
    %159 = vmatpush1.msra.mxu0 0.0
    %160 = vmatprep.subr.mxu0 0.0
    %161 = vmatpush1.msra.mxu0 0.0
    %162 = vmatprep.subr.mxu0 0.0
    %163 = vmatpush1.msra.mxu0 0.0
    %164 = vmatprep.subr.mxu0 0.0
    %165 = vmatpush1.msra.mxu0 0.0
    %166 = vmatprep.subr.mxu0 0.0
    %167 = vmatpush1.msra.mxu0 0.0
    %168 = vmatprep.subr.mxu0 0.0
    %169 = vmatpush1.msra.mxu0 0.0
    %170 = vmatprep.subr.mxu0 0.0
    %171 = vmatpush1.msra.mxu0 0.0
    %172 = vmatprep.subr.mxu0 0.0
    %173 = vmatpush1.msra.mxu0 0.0
    %174 = vmatprep.subr.mxu0 0.0
    %175 = vmatpush1.msra.mxu0 0.0
    %176 = vmatprep.subr.mxu0 0.0
    %177 = vmatpush1.msra.mxu0 0.0
    %178 = vmatprep.subr.mxu0 0.0
    %179 = vmatpush1.msra.mxu0 0.0
    %180 = vmatprep.subr.mxu0 0.0
    %181 = vmatpush1.msra.mxu0 0.0
    %182 = vmatprep.subr.mxu0 0.0
    %183 = vmatpush1.msra.mxu0 0.0
    %184 = vmatprep.mubr.f32.mxu0 0.0
    %185 = vmatmul.mubr.f32.gmra.mrb[0].mxu0 %v96
    %v186 = vpop.f32.mrb[0].mxu0
    %v187 = vadd.f32 %v118, %v186
    %v188 = vpop.f32.mrb[0].mxu0
    %189 = vdwg.mxu0
    %v190 = vld [vmem:[#allocation5] sm:$0xff]
    %v191 = vld [vmem:[#allocation5 + $0x8] sm:$0xff]
    %v192 = vld [vmem:[#allocation5 + $0x10] sm:$0xff]
    %v193 = vld [vmem:[#allocation5 + $0x18] sm:$0xff]
    %v194 = vld [vmem:[#allocation8] sm:$0xff]
    %v195 = vld [vmem:[#allocation8 + $0x8] sm:$0xff]
    %v196 = vld [vmem:[#allocation8 + $0x10] sm:$0xff]
    %v197 = vld [vmem:[#allocation8 + $0x18] sm:$0xff]
    %v198 = vld [vmem:[#allocation8 + $0x20] sm:$0xff]
    %v199 = vld [vmem:[#allocation8 + $0x28] sm:$0xff]
    %v200 = vld [vmem:[#allocation8 + $0x30] sm:$0xff]
    %v201 = vld [vmem:[#allocation8 + $0x38] sm:$0xff]
    %v202 = vld [vmem:[#allocation8 + $0x40] sm:$0xff]
    %v203 = vld [vmem:[#allocation8 + $0x48] sm:$0xff]
    %v204 = vld [vmem:[#allocation8 + $0x50] sm:$0xff]
    %v205 = vld [vmem:[#allocation8 + $0x58] sm:$0xff]
    %v206 = vld [vmem:[#allocation8 + $0x60] sm:$0xff]
    %v207 = vld [vmem:[#allocation8 + $0x68] sm:$0xff]
    %v208 = vld [vmem:[#allocation8 + $0x70] sm:$0xff]
    %v209 = vld [vmem:[#allocation8 + $0x78] sm:$0xff]
    %v210 = vld [vmem:[%s5] sm:$0x1]
    %v212 = vlaneseq
    %v213 = vshrl.u32 %v212, 7
    %v214 = vsub.s32 0, %v213
    %v215 = vrot.slane %v210, %v214
    %217 = vmatprep.subr.mxu0 0.0
    %218 = vmatpush1.msra.mxu0 %v194
    %219 = vmatprep.subr.mxu0 0.0
    %220 = vmatpush1.msra.mxu0 %v195
    %221 = vmatprep.subr.mxu0 0.0
    %222 = vmatpush1.msra.mxu0 %v196
    %223 = vmatprep.subr.mxu0 0.0
    %224 = vmatpush1.msra.mxu0 %v197
    %225 = vmatprep.subr.mxu0 0.0
    %226 = vmatpush1.msra.mxu0 %v198
    %227 = vmatprep.subr.mxu0 0.0
    %228 = vmatpush1.msra.mxu0 %v199
    %229 = vmatprep.subr.mxu0 0.0
    %230 = vmatpush1.msra.mxu0 %v200
    %231 = vmatprep.subr.mxu0 0.0
    %232 = vmatpush1.msra.mxu0 %v201
    %233 = vmatprep.subr.mxu0 0.0
    %234 = vmatpush1.msra.mxu0 %v202
    %235 = vmatprep.subr.mxu0 0.0
    %236 = vmatpush1.msra.mxu0 %v203
    %237 = vmatprep.subr.mxu0 0.0
    %238 = vmatpush1.msra.mxu0 %v204
    %239 = vmatprep.subr.mxu0 0.0
    %240 = vmatpush1.msra.mxu0 %v205
    %241 = vmatprep.subr.mxu0 0.0
    %242 = vmatpush1.msra.mxu0 %v206
    %243 = vmatprep.subr.mxu0 0.0
    %244 = vmatpush1.msra.mxu0 %v207
    %245 = vmatprep.subr.mxu0 0.0
    %246 = vmatpush1.msra.mxu0 %v208
    %247 = vmatprep.subr.mxu0 0.0
    %248 = vmatpush1.msra.mxu0 %v209
    %249 = vmatprep.subr.mxu0 0.0
    %250 = vmatpush1.msra.mxu0 0.0
    %251 = vmatprep.subr.mxu0 0.0
    %252 = vmatpush1.msra.mxu0 0.0
    %253 = vmatprep.subr.mxu0 0.0
    %254 = vmatpush1.msra.mxu0 0.0
    %255 = vmatprep.subr.mxu0 0.0
    %256 = vmatpush1.msra.mxu0 0.0
    %257 = vmatprep.subr.mxu0 0.0
    %258 = vmatpush1.msra.mxu0 0.0
    %259 = vmatprep.subr.mxu0 0.0
    %260 = vmatpush1.msra.mxu0 0.0
    %261 = vmatprep.subr.mxu0 0.0
    %262 = vmatpush1.msra.mxu0 0.0
    %263 = vmatprep.subr.mxu0 0.0
    %264 = vmatpush1.msra.mxu0 0.0
    %265 = vmatprep.subr.mxu0 0.0
    %266 = vmatpush1.msra.mxu0 0.0
    %267 = vmatprep.subr.mxu0 0.0
    %268 = vmatpush1.msra.mxu0 0.0
    %269 = vmatprep.subr.mxu0 0.0
    %270 = vmatpush1.msra.mxu0 0.0
    %271 = vmatprep.subr.mxu0 0.0
    %272 = vmatpush1.msra.mxu0 0.0
    %273 = vmatprep.subr.mxu0 0.0
    %274 = vmatpush1.msra.mxu0 0.0
    %275 = vmatprep.subr.mxu0 0.0
    %276 = vmatpush1.msra.mxu0 0.0
    %277 = vmatprep.subr.mxu0 0.0
    %278 = vmatpush1.msra.mxu0 0.0
    %279 = vmatprep.subr.mxu0 0.0
    %280 = vmatpush1.msra.mxu0 0.0
    %281 = vmatprep.mubr.f32.mxu0 0.0
    %282 = vmatmul.mubr.f32.gmra.mrb[0].mxu0 %v190
    %v283 = vpop.f32.mrb[0].mxu0
    %v284 = vadd.f32 %v215, %v283
    %v285 = vpop.f32.mrb[0].mxu0
    %286 = vmatprep.mubr.f32.mxu0 0.0
    %287 = vmatmul.mubr.f32.gmra.mrb[0].mxu0 %v191
    %v288 = vpop.f32.mrb[0].mxu0
    %v289 = vadd.f32 %v215, %v288
    %v290 = vpop.f32.mrb[0].mxu0
    %291 = vmatprep.mubr.f32.mxu0 0.0
    %292 = vmatmul.mubr.f32.gmra.mrb[0].mxu0 %v192
    %v293 = vpop.f32.mrb[0].mxu0
    %v294 = vadd.f32 %v215, %v293
    %v295 = vpop.f32.mrb[0].mxu0
    %296 = vmatprep.mubr.f32.mxu0 0.0
    %297 = vmatmul.mubr.f32.gmra.mrb[0].mxu0 %v193
    %v298 = vpop.f32.mrb[0].mxu0
    %v299 = vadd.f32 %v215, %v298
    %v300 = vpop.f32.mrb[0].mxu0
    %301 = vdwg.mxu0
    %v302 = vld [vmem:[#allocation10] sm:$0xff]
    %v303 = vld [vmem:[#allocation10 + $0x8] sm:$0xff]
    %v304 = vld [vmem:[#allocation10 + $0x10] sm:$0xff]
    %v305 = vld [vmem:[#allocation10 + $0x18] sm:$0xff]
    %v306 = vld [vmem:[#allocation10 + $0x20] sm:$0xff]
    %v307 = vld [vmem:[#allocation10 + $0x28] sm:$0xff]
    %v308 = vld [vmem:[#allocation10 + $0x30] sm:$0xff]
    %v309 = vld [vmem:[#allocation10 + $0x38] sm:$0xff]
    %v310 = vld [vmem:[#allocation10 + $0x40] sm:$0xff]
    %v311 = vld [vmem:[#allocation10 + $0x48] sm:$0xff]
    %v312 = vld [vmem:[#allocation10 + $0x50] sm:$0xff]
    %v313 = vld [vmem:[#allocation10 + $0x58] sm:$0xff]
    %v314 = vld [vmem:[#allocation10 + $0x60] sm:$0xff]
    %v315 = vld [vmem:[#allocation10 + $0x68] sm:$0xff]
    %v316 = vld [vmem:[#allocation10 + $0x70] sm:$0xff]
    %v317 = vld [vmem:[#allocation10 + $0x78] sm:$0xff]
    %v318 = vld [vmem:[%s7] sm:$0x1]
    %v320 = vlaneseq
    %v321 = vshrl.u32 %v320, 7
    %v322 = vsub.s32 0, %v321
    %v323 = vrot.slane %v318, %v322
    %325 = vmatprep.subr.mxu0 0.0
    %326 = vmatpush1.msra.mxu0 %v302
    %327 = vmatprep.subr.mxu0 0.0
    %328 = vmatpush1.msra.mxu0 %v303
    %329 = vmatprep.subr.mxu0 0.0
    %330 = vmatpush1.msra.mxu0 %v304
    %331 = vmatprep.subr.mxu0 0.0
    %332 = vmatpush1.msra.mxu0 %v305
    %333 = vmatprep.subr.mxu0 0.0
    %334 = vmatpush1.msra.mxu0 %v306
    %335 = vmatprep.subr.mxu0 0.0
    %336 = vmatpush1.msra.mxu0 %v307
    %337 = vmatprep.subr.mxu0 0.0
    %338 = vmatpush1.msra.mxu0 %v308
    %339 = vmatprep.subr.mxu0 0.0
    %340 = vmatpush1.msra.mxu0 %v309
    %341 = vmatprep.subr.mxu0 0.0
    %342 = vmatpush1.msra.mxu0 %v310
    %343 = vmatprep.subr.mxu0 0.0
    %344 = vmatpush1.msra.mxu0 %v311
    %345 = vmatprep.subr.mxu0 0.0
    %346 = vmatpush1.msra.mxu0 %v312
    %347 = vmatprep.subr.mxu0 0.0
    %348 = vmatpush1.msra.mxu0 %v313
    %349 = vmatprep.subr.mxu0 0.0
    %350 = vmatpush1.msra.mxu0 %v314
    %351 = vmatprep.subr.mxu0 0.0
    %352 = vmatpush1.msra.mxu0 %v315
    %353 = vmatprep.subr.mxu0 0.0
    %354 = vmatpush1.msra.mxu0 %v316
    %355 = vmatprep.subr.mxu0 0.0
    %356 = vmatpush1.msra.mxu0 %v317
    %357 = vmatprep.subr.mxu0 0.0
    %358 = vmatpush1.msra.mxu0 0.0
    %359 = vmatprep.subr.mxu0 0.0
    %360 = vmatpush1.msra.mxu0 0.0
    %361 = vmatprep.subr.mxu0 0.0
    %362 = vmatpush1.msra.mxu0 0.0
    %363 = vmatprep.subr.mxu0 0.0
    %364 = vmatpush1.msra.mxu0 0.0
    %365 = vmatprep.subr.mxu0 0.0
    %366 = vmatpush1.msra.mxu0 0.0
    %367 = vmatprep.subr.mxu0 0.0
    %368 = vmatpush1.msra.mxu0 0.0
    %369 = vmatprep.subr.mxu0 0.0
    %370 = vmatpush1.msra.mxu0 0.0
    %371 = vmatprep.subr.mxu0 0.0
    %372 = vmatpush1.msra.mxu0 0.0
    %373 = vmatprep.subr.mxu0 0.0
    %374 = vmatpush1.msra.mxu0 0.0
    %375 = vmatprep.subr.mxu0 0.0
    %376 = vmatpush1.msra.mxu0 0.0
    %377 = vmatprep.subr.mxu0 0.0
    %378 = vmatpush1.msra.mxu0 0.0
    %379 = vmatprep.subr.mxu0 0.0
    %380 = vmatpush1.msra.mxu0 0.0
    %381 = vmatprep.subr.mxu0 0.0
    %382 = vmatpush1.msra.mxu0 0.0
    %383 = vmatprep.subr.mxu0 0.0
    %384 = vmatpush1.msra.mxu0 0.0
    %385 = vmatprep.subr.mxu0 0.0
    %386 = vmatpush1.msra.mxu0 0.0
    %387 = vmatprep.subr.mxu0 0.0
    %388 = vmatpush1.msra.mxu0 0.0
    %389 = vmatprep.mubr.f32.mxu0 0.0
    %390 = vmatmul.mubr.f32.gmra.mrb[0].mxu0 %v190
    %v391 = vpop.f32.mrb[0].mxu0
    %v392 = vadd.f32 %v323, %v391
    %v393 = vpop.f32.mrb[0].mxu0
    %394 = vmatprep.mubr.f32.mxu0 0.0
    %395 = vmatmul.mubr.f32.gmra.mrb[0].mxu0 %v191
    %v396 = vpop.f32.mrb[0].mxu0
    %v397 = vadd.f32 %v323, %v396
    %v398 = vpop.f32.mrb[0].mxu0
    %399 = vmatprep.mubr.f32.mxu0 0.0
    %400 = vmatmul.mubr.f32.gmra.mrb[0].mxu0 %v192
    %v401 = vpop.f32.mrb[0].mxu0
    %v402 = vadd.f32 %v323, %v401
    %v403 = vpop.f32.mrb[0].mxu0
    %404 = vmatprep.mubr.f32.mxu0 0.0
    %405 = vmatmul.mubr.f32.gmra.mrb[0].mxu0 %v193
    %v406 = vpop.f32.mrb[0].mxu0
    %v407 = vadd.f32 %v323, %v406
    %v408 = vpop.f32.mrb[0].mxu0
    %409 = vdwg.mxu0
    %410 = vmatprep.subr.mxu0 0.0
    %411 = vmatpush1.xpose.msra.mxu0 %v187
    %412 = vmatprep.subr.mxu0 0.0
    %413 = vmatpush1.xpose.msra.mxu0 0.0
    %414 = vmatprep.subr.mxu0 0.0
    %415 = vmatpush1.xpose.msra.mxu0 0.0
    %416 = vmatprep.subr.mxu0 0.0
    %417 = vmatpush1.xpose.msra.mxu0 0.0
    %418 = vmatprep.subr.mxu0 0.0
    %419 = vmatpush1.xpose.msra.mxu0 0.0
    %420 = vmatprep.subr.mxu0 0.0
    %421 = vmatpush1.xpose.msra.mxu0 0.0
    %422 = vmatprep.subr.mxu0 0.0
    %423 = vmatpush1.xpose.msra.mxu0 0.0
    %424 = vmatprep.subr.mxu0 0.0
    %425 = vmatpush1.xpose.msra.mxu0 0.0
    %426 = vmatprep.subr.mxu0 0.0
    %427 = vmatpush1.xpose.msra.mxu0 0.0
    %428 = vmatprep.subr.mxu0 0.0
    %429 = vmatpush1.xpose.msra.mxu0 0.0
    %430 = vmatprep.subr.mxu0 0.0
    %431 = vmatpush1.xpose.msra.mxu0 0.0
    %432 = vmatprep.subr.mxu0 0.0
    %433 = vmatpush1.xpose.msra.mxu0 0.0
    %434 = vmatprep.subr.mxu0 0.0
    %435 = vmatpush1.xpose.msra.mxu0 0.0
    %436 = vmatprep.subr.mxu0 0.0
    %437 = vmatpush1.xpose.msra.mxu0 0.0
    %438 = vmatprep.subr.mxu0 0.0
    %439 = vmatpush1.xpose.msra.mxu0 0.0
    %440 = vmatprep.subr.mxu0 0.0
    %441 = vmatpush1.xpose.msra.mxu0 0.0
    %442 = vmatprep.subr.mxu0 0.0
    %443 = vmatpush1.xpose.msra.mxu0 0.0
    %444 = vmatprep.subr.mxu0 0.0
    %445 = vmatpush1.xpose.msra.mxu0 0.0
    %446 = vmatprep.subr.mxu0 0.0
    %447 = vmatpush1.xpose.msra.mxu0 0.0
    %448 = vmatprep.subr.mxu0 0.0
    %449 = vmatpush1.xpose.msra.mxu0 0.0
    %450 = vmatprep.subr.mxu0 0.0
    %451 = vmatpush1.xpose.msra.mxu0 0.0
    %452 = vmatprep.subr.mxu0 0.0
    %453 = vmatpush1.xpose.msra.mxu0 0.0
    %454 = vmatprep.subr.mxu0 0.0
    %455 = vmatpush1.xpose.msra.mxu0 0.0
    %456 = vmatprep.subr.mxu0 0.0
    %457 = vmatpush1.xpose.msra.mxu0 0.0
    %458 = vmatprep.subr.mxu0 0.0
    %459 = vmatpush1.xpose.msra.mxu0 0.0
    %460 = vmatprep.subr.mxu0 0.0
    %461 = vmatpush1.xpose.msra.mxu0 0.0
    %462 = vmatprep.subr.mxu0 0.0
    %463 = vmatpush1.xpose.msra.mxu0 0.0
    %464 = vmatprep.subr.mxu0 0.0
    %465 = vmatpush1.xpose.msra.mxu0 0.0
    %466 = vmatprep.subr.mxu0 0.0
    %467 = vmatpush1.xpose.msra.mxu0 0.0
    %468 = vmatprep.subr.mxu0 0.0
    %469 = vmatpush1.xpose.msra.mxu0 0.0
    %470 = vmatprep.subr.mxu0 0.0
    %471 = vmatpush1.xpose.msra.mxu0 0.0
    %472 = vmatprep.subr.mxu0 0.0
    %473 = vmatpush1.xpose.msra.mxu0 0.0
    %474 = vmatprep.mubr.f32.mxu0 0.0
    %475 = vmatmul.mubr.f32.gmra.mrb[0].mxu0 %v284
    %v476 = vpop.f32.mrb[0].mxu0
    %v477 = vadd.f32 0.0, %v476
    %v478 = vpop.f32.mrb[0].mxu0
    %479 = vmatprep.mubr.f32.mxu0 0.0
    %480 = vmatmul.mubr.f32.gmra.mrb[0].mxu0 %v289
    %v481 = vpop.f32.mrb[0].mxu0
    %v482 = vadd.f32 0.0, %v481
    %v483 = vpop.f32.mrb[0].mxu0
    %484 = vmatprep.mubr.f32.mxu0 0.0
    %485 = vmatmul.mubr.f32.gmra.mrb[0].mxu0 %v294
    %v486 = vpop.f32.mrb[0].mxu0
    %v487 = vadd.f32 0.0, %v486
    %v488 = vpop.f32.mrb[0].mxu0
    %489 = vmatprep.mubr.f32.mxu0 0.0
    %490 = vmatmul.mubr.f32.gmra.mrb[0].mxu0 %v299
    %v491 = vpop.f32.mrb[0].mxu0
    %v492 = vadd.f32 0.0, %v491
    %v493 = vpop.f32.mrb[0].mxu0
    %494 = vdwg.mxu0
    %495 = vxpose.xlu0.b32.start [1/16] %v477, 128
    %496 = vxpose.xlu0.b32.cont [2/16] %v482, 128
    %497 = vxpose.xlu0.b32.cont [3/16] 0.0, 128
    %498 = vxpose.xlu0.b32.cont [4/16] 0.0, 128
    %499 = vxpose.xlu0.b32.cont [5/16] 0.0, 128
    %500 = vxpose.xlu0.b32.cont [6/16] 0.0, 128
    %501 = vxpose.xlu0.b32.cont [7/16] 0.0, 128
    %502 = vxpose.xlu0.b32.cont [8/16] 0.0, 128
    %503 = vxpose.xlu0.b32.cont [9/16] 0.0, 128
    %504 = vxpose.xlu0.b32.cont [10/16] 0.0, 128
    %505 = vxpose.xlu0.b32.cont [11/16] 0.0, 128
    %506 = vxpose.xlu0.b32.cont [12/16] 0.0, 128
    %507 = vxpose.xlu0.b32.cont [13/16] 0.0, 128
    %508 = vxpose.xlu0.b32.cont [14/16] 0.0, 128
    %509 = vxpose.xlu0.b32.cont [15/16] 0.0, 128
    %510 = vxpose.xlu0.b32.end [16/16] 0.0, 128
    %v511 = vpop.trf.xlu0
    %v512 = vpop.trf.xlu0
    %v513 = vpop.trf.xlu0
    %v514 = vpop.trf.xlu0
    %v515 = vpop.trf.xlu0
    %v516 = vpop.trf.xlu0
    %v517 = vpop.trf.xlu0
    %v518 = vpop.trf.xlu0
    %v519 = vpop.trf.xlu0
    %v520 = vpop.trf.xlu0
    %v521 = vpop.trf.xlu0
    %v522 = vpop.trf.xlu0
    %v523 = vpop.trf.xlu0
    %v524 = vpop.trf.xlu0
    %v525 = vpop.trf.xlu0
    %v526 = vpop.trf.xlu0
    %527 = vxpose.xlu0.b32.start [1/16] %v487, 128
    %528 = vxpose.xlu0.b32.cont [2/16] %v492, 128
    %529 = vxpose.xlu0.b32.cont [3/16] 0.0, 128
    %530 = vxpose.xlu0.b32.cont [4/16] 0.0, 128
    %531 = vxpose.xlu0.b32.cont [5/16] 0.0, 128
    %532 = vxpose.xlu0.b32.cont [6/16] 0.0, 128
    %533 = vxpose.xlu0.b32.cont [7/16] 0.0, 128
    %534 = vxpose.xlu0.b32.cont [8/16] 0.0, 128
    %535 = vxpose.xlu0.b32.cont [9/16] 0.0, 128
    %536 = vxpose.xlu0.b32.cont [10/16] 0.0, 128
    %537 = vxpose.xlu0.b32.cont [11/16] 0.0, 128
    %538 = vxpose.xlu0.b32.cont [12/16] 0.0, 128
    %539 = vxpose.xlu0.b32.cont [13/16] 0.0, 128
    %540 = vxpose.xlu0.b32.cont [14/16] 0.0, 128
    %541 = vxpose.xlu0.b32.cont [15/16] 0.0, 128
    %542 = vxpose.xlu0.b32.end [16/16] 0.0, 128
    %v543 = vpop.trf.xlu0
    %v544 = vpop.trf.xlu0
    %v545 = vpop.trf.xlu0
    %v546 = vpop.trf.xlu0
    %v547 = vpop.trf.xlu0
    %v548 = vpop.trf.xlu0
    %v549 = vpop.trf.xlu0
    %v550 = vpop.trf.xlu0
    %v551 = vpop.trf.xlu0
    %v552 = vpop.trf.xlu0
    %v553 = vpop.trf.xlu0
    %v554 = vpop.trf.xlu0
    %v555 = vpop.trf.xlu0
    %v556 = vpop.trf.xlu0
    %v557 = vpop.trf.xlu0
    %v558 = vpop.trf.xlu0
    %vm559 = vcmask 130048
    %v560 = vsel %vm559, %v511, -inf
    %561 = vmax.xlane.f32.xlu0 %v560
    %v562 = vpop.xlane.xlu0 %561
    %v563 = vsel %vm559, %v543, -inf
    %564 = vmax.xlane.f32.xlu0 %v563
    %v565 = vpop.xlane.xlu0 %564
    %v566 = vsub.f32 %v511, %v562
    %v567 = vsub.f32 %v543, %v565
    %v568 = vmul.f32 %v566, 1.442695
    %v569 = vpow.pop %v568
    %v570 = vmul.f32 %v567, 1.442695
    %v571 = vpow.pop %v570
    %v572 = vsel %vm559, %v569, 0.0
    %573 = vadd.xlane.f32.xlu0 %v572
    %v574 = vpop.xlane.xlu0 %573
    %v575 = vsel %vm559, %v571, 0.0
    %576 = vadd.xlane.f32.xlu0 %v575
    %v577 = vpop.xlane.xlu0 %576
    %v578 = vrcp.pop %v574
    %v579 = vrcp.pop %v577
    %v580 = vmul.f32 %v578, 0.17677669
    %v581 = vmul.f32 %v579, 0.17677669
    %v582 = vmul.f32 %v569, %v580
    %v583 = vmul.f32 %v571, %v581
    %v585 = vsel %vm559, %v582, 0
    %587 = vmatprep.subr.mxu0 0.0
    %588 = vmatpush1.msra.mxu0 %v392
    %589 = vmatprep.subr.mxu0 0.0
    %590 = vmatpush1.msra.mxu0 %v397
    %591 = vmatprep.subr.mxu0 0.0
    %592 = vmatpush1.msra.mxu0 0.0
    %593 = vmatprep.subr.mxu0 0.0
    %594 = vmatpush1.msra.mxu0 0.0
    %595 = vmatprep.subr.mxu0 0.0
    %596 = vmatpush1.msra.mxu0 0.0
    %597 = vmatprep.subr.mxu0 0.0
    %598 = vmatpush1.msra.mxu0 0.0
    %599 = vmatprep.subr.mxu0 0.0
    %600 = vmatpush1.msra.mxu0 0.0
    %601 = vmatprep.subr.mxu0 0.0
    %602 = vmatpush1.msra.mxu0 0.0
    %603 = vmatprep.subr.mxu0 0.0
    %604 = vmatpush1.msra.mxu0 0.0
    %605 = vmatprep.subr.mxu0 0.0
    %606 = vmatpush1.msra.mxu0 0.0
    %607 = vmatprep.subr.mxu0 0.0
    %608 = vmatpush1.msra.mxu0 0.0
    %609 = vmatprep.subr.mxu0 0.0
    %610 = vmatpush1.msra.mxu0 0.0
    %611 = vmatprep.subr.mxu0 0.0
    %612 = vmatpush1.msra.mxu0 0.0
    %613 = vmatprep.subr.mxu0 0.0
    %614 = vmatpush1.msra.mxu0 0.0
    %615 = vmatprep.subr.mxu0 0.0
    %616 = vmatpush1.msra.mxu0 0.0
    %617 = vmatprep.subr.mxu0 0.0
    %618 = vmatpush1.msra.mxu0 0.0
    %619 = vmatprep.subr.mxu0 0.0
    %620 = vmatpush1.msra.mxu0 0.0
    %621 = vmatprep.subr.mxu0 0.0
    %622 = vmatpush1.msra.mxu0 0.0
    %623 = vmatprep.subr.mxu0 0.0
    %624 = vmatpush1.msra.mxu0 0.0
    %625 = vmatprep.subr.mxu0 0.0
    %626 = vmatpush1.msra.mxu0 0.0
    %627 = vmatprep.subr.mxu0 0.0
    %628 = vmatpush1.msra.mxu0 0.0
    %629 = vmatprep.subr.mxu0 0.0
    %630 = vmatpush1.msra.mxu0 0.0
    %631 = vmatprep.subr.mxu0 0.0
    %632 = vmatpush1.msra.mxu0 0.0
    %633 = vmatprep.subr.mxu0 0.0
    %634 = vmatpush1.msra.mxu0 0.0
    %635 = vmatprep.subr.mxu0 0.0
    %636 = vmatpush1.msra.mxu0 0.0
    %637 = vmatprep.subr.mxu0 0.0
    %638 = vmatpush1.msra.mxu0 0.0
    %639 = vmatprep.subr.mxu0 0.0
    %640 = vmatpush1.msra.mxu0 0.0
    %641 = vmatprep.subr.mxu0 0.0
    %642 = vmatpush1.msra.mxu0 0.0
    %643 = vmatprep.subr.mxu0 0.0
    %644 = vmatpush1.msra.mxu0 0.0
    %645 = vmatprep.subr.mxu0 0.0
    %646 = vmatpush1.msra.mxu0 0.0
    %647 = vmatprep.subr.mxu0 0.0
    %648 = vmatpush1.msra.mxu0 0.0
    %649 = vmatprep.subr.mxu0 0.0
    %650 = vmatpush1.msra.mxu0 0.0
    %651 = vmatprep.mubr.f32.mxu0 0.0
    %652 = vmatmul.mubr.f32.gmra.mrb[0].mxu0 %v585
    %v653 = vpop.f32.mrb[0].mxu0
    %v654 = vadd.f32 0.0, %v653
    %v655 = vpop.f32.mrb[0].mxu0
    %656 = vdwg.mxu0
    %v658 = vsel %vm559, %v583, 0
    %660 = vmatprep.subr.mxu0 0.0
    %661 = vmatpush1.msra.mxu0 %v402
    %662 = vmatprep.subr.mxu0 0.0
    %663 = vmatpush1.msra.mxu0 %v407
    %664 = vmatprep.subr.mxu0 0.0
    %665 = vmatpush1.msra.mxu0 0.0
    %666 = vmatprep.subr.mxu0 0.0
    %667 = vmatpush1.msra.mxu0 0.0
    %668 = vmatprep.subr.mxu0 0.0
    %669 = vmatpush1.msra.mxu0 0.0
    %670 = vmatprep.subr.mxu0 0.0
    %671 = vmatpush1.msra.mxu0 0.0
    %672 = vmatprep.subr.mxu0 0.0
    %673 = vmatpush1.msra.mxu0 0.0
    %674 = vmatprep.subr.mxu0 0.0
    %675 = vmatpush1.msra.mxu0 0.0
    %676 = vmatprep.subr.mxu0 0.0
    %677 = vmatpush1.msra.mxu0 0.0
    %678 = vmatprep.subr.mxu0 0.0
    %679 = vmatpush1.msra.mxu0 0.0
    %680 = vmatprep.subr.mxu0 0.0
    %681 = vmatpush1.msra.mxu0 0.0
    %682 = vmatprep.subr.mxu0 0.0
    %683 = vmatpush1.msra.mxu0 0.0
    %684 = vmatprep.subr.mxu0 0.0
    %685 = vmatpush1.msra.mxu0 0.0
    %686 = vmatprep.subr.mxu0 0.0
    %687 = vmatpush1.msra.mxu0 0.0
    %688 = vmatprep.subr.mxu0 0.0
    %689 = vmatpush1.msra.mxu0 0.0
    %690 = vmatprep.subr.mxu0 0.0
    %691 = vmatpush1.msra.mxu0 0.0
    %692 = vmatprep.subr.mxu0 0.0
    %693 = vmatpush1.msra.mxu0 0.0
    %694 = vmatprep.subr.mxu0 0.0
    %695 = vmatpush1.msra.mxu0 0.0
    %696 = vmatprep.subr.mxu0 0.0
    %697 = vmatpush1.msra.mxu0 0.0
    %698 = vmatprep.subr.mxu0 0.0
    %699 = vmatpush1.msra.mxu0 0.0
    %700 = vmatprep.subr.mxu0 0.0
    %701 = vmatpush1.msra.mxu0 0.0
    %702 = vmatprep.subr.mxu0 0.0
    %703 = vmatpush1.msra.mxu0 0.0
    %704 = vmatprep.subr.mxu0 0.0
    %705 = vmatpush1.msra.mxu0 0.0
    %706 = vmatprep.subr.mxu0 0.0
    %707 = vmatpush1.msra.mxu0 0.0
    %708 = vmatprep.subr.mxu0 0.0
    %709 = vmatpush1.msra.mxu0 0.0
    %710 = vmatprep.subr.mxu0 0.0
    %711 = vmatpush1.msra.mxu0 0.0
    %712 = vmatprep.subr.mxu0 0.0
    %713 = vmatpush1.msra.mxu0 0.0
    %714 = vmatprep.subr.mxu0 0.0
    %715 = vmatpush1.msra.mxu0 0.0
    %716 = vmatprep.subr.mxu0 0.0
    %717 = vmatpush1.msra.mxu0 0.0
    %718 = vmatprep.subr.mxu0 0.0
    %719 = vmatpush1.msra.mxu0 0.0
    %720 = vmatprep.subr.mxu0 0.0
    %721 = vmatpush1.msra.mxu0 0.0
    %722 = vmatprep.subr.mxu0 0.0
    %723 = vmatpush1.msra.mxu0 0.0
    %724 = vmatprep.mubr.f32.mxu0 0.0
    %725 = vmatmul.mubr.f32.gmra.mrb[0].mxu0 %v658
    %v726 = vpop.f32.mrb[0].mxu0
    %v727 = vadd.f32 0.0, %v726
    %v728 = vpop.f32.mrb[0].mxu0
    %729 = vdwg.mxu0
    %730 = vst [vmem:[#allocation11] sm:$0xff] %v654
    %731 = vst [vmem:[#allocation11 + $0x8] sm:$0xff] %v727
    // Predicated region
    $region54: #{tpu_custom_call.1} parent=1 // pred_check
      _
    $region55: #{tpu_custom_call.1} parent=1 // pred_check_branch
      %733 = sbr.rel (0) target = $region57
    $region56: #{tpu_custom_call.1} parent=1 // pred_region
      %s735 = ssub.s32 256, 256
      %736 = vsyncadd [#allocation4], %s735
      %s737 = sshll.u32 [#allocation11], 4
      %s738 = int_to_ptr.vmem [resolvable:$true] %s737
      %743 = dma.vmem_to_hbm [thread:$0]  %s738, 256, %s8, [#allocation4], 128, 128, 8
    $region57: #{tpu_custom_call.1} parent=1 // pred_fallthru
      _
    // Predicated region
    $region58: #{tpu_custom_call.1} parent=1 // pred_check
      _
    $region59: #{tpu_custom_call.1} parent=1 // pred_check_branch
      %745 = sbr.rel (0) target = $region61
    $region60: #{tpu_custom_call.1} parent=1 // pred_region
      %746 = dma.done [#allocation4], 256
    $region61: #{tpu_custom_call.1} parent=1 // pred_fallthru
      _
    %747 = vsyncpa [#allocation3], 1
    %748 = vsyncpa [#allocation6], 1
    %749 = vsyncpa [#allocation9], 1
    %750 = vsyncpa [#allocation4], 1

// kernel: tpu_custom_call.1
$region0: #{tpu_custom_call.1}
  #allocation0 [shape = 'u32[]', space=smem, size = 0x4, offset = 0x4, fixed_abs, tag = 'smem constant byte address 0x4 - core index']
  #allocation1 [shape = 'u32[144,128]{1,0:T(1,128)}', space=vmem, size = 0x12000, scoped, tag = 'internal scratch']
  %s0 = inlined_call_operand.hbm [shape: f32[8,128], index: 0, kind: input, shape index: {}]
  %s1 = inlined_call_operand.hbm [shape: f32[2,16,128], index: 1, kind: input, shape index: {}]
  %s2 = inlined_call_operand.hbm [shape: f32[128,128], index: 2, kind: input, shape index: {}]
  %s3 = inlined_call_operand.vmem [shape: f32[1,128], index: 3, kind: input, shape index: {}]
  %s4 = inlined_call_operand.hbm [shape: f32[128,128], index: 4, kind: input, shape index: {}]
  %s5 = inlined_call_operand.vmem [shape: f32[1,128], index: 5, kind: input, shape index: {}]
  %s6 = inlined_call_operand.hbm [shape: f32[128,128], index: 6, kind: input, shape index: {}]
  %s7 = inlined_call_operand.vmem [shape: f32[1,128], index: 7, kind: input, shape index: {}]
  %s8 = inlined_call_operand.hbm [shape: f32[2,8,128], index: 8, kind: output, shape index: {}]
  %s9 = sld [smem:[#allocation0]]
  $region62: #{tpu_custom_call.1} parent=0
    _
  %s11 = ssub.s32 1, %s9
  %s12 = scalar_select 0, %s11, %s9
  $region1: #{tpu_custom_call.1} parent=0
    #allocation2 [shape = 'u8[4096]{0}', space=vmem, size = 0x1000, scoped, tag = 'input window, operand 0, single buffered']
    #allocation3 [shape = 's32[1]{0}', space=sflag, size = 0x4, scoped, tag = 'scoped memory for tpu_custom_call.1']
    #allocation4 [shape = 's32[1]{0}', space=sflag, size = 0x4, scoped, tag = 'scoped memory for tpu_custom_call.1']
    #allocation5 [shape = 'u8[16384]{0}', space=vmem, size = 0x4000, scoped, tag = 'input window, operand 1, single buffered']
    #allocation6 [shape = 's32[1]{0}', space=sflag, size = 0x4, scoped, tag = 'scoped memory for tpu_custom_call.1']
    #allocation7 [shape = 'u8[65536]{0}', space=vmem, size = 0x10000, scoped, tag = 'input window, operand 2, single buffered']
    #allocation8 [shape = 'u8[65536]{0}', space=vmem, size = 0x10000, scoped, tag = 'input window, operand 4, single buffered']
    #allocation9 [shape = 's32[1]{0}', space=sflag, size = 0x4, scoped, tag = 'scoped memory for tpu_custom_call.1']
    #allocation10 [shape = 'u8[65536]{0}', space=vmem, size = 0x10000, scoped, tag = 'input window, operand 6, single buffered']
    #allocation11 [shape = 'u8[8192]{0}', space=vmem, size = 0x2000, scoped, tag = 'output window, operand 0, single buffered']
    %13 = vsyncpa [#allocation3], 0
    %14 = vsyncpa [#allocation6], 0
    %15 = vsyncpa [#allocation9], 0
    %16 = vsyncpa [#allocation4], 0
    // Predicated region
    $region2: #{tpu_custom_call.1} parent=1 // pred_check
      _
    $region3: #{tpu_custom_call.1} parent=1 // pred_check_branch
      %18 = sbr.rel (0) target = $region5
    $region4: #{tpu_custom_call.1} parent=1 // pred_region
      %s20 = ssub.s32 128, 128
      %21 = vsyncadd [#allocation3], %s20
      %s23 = sshll.u32 [#allocation2], 4
      %s24 = int_to_ptr.vmem [resolvable:$true] %s23
      %26 = dma.hbm_to_vmem [thread:$0]  %s0, 128, %s24, [#allocation3]
    $region5: #{tpu_custom_call.1} parent=1 // pred_fallthru
      _
    // Predicated region
    $region6: #{tpu_custom_call.1} parent=1 // pred_check
      _
    $region7: #{tpu_custom_call.1} parent=1 // pred_check_branch
      %28 = sbr.rel (0) target = $region9
    $region8: #{tpu_custom_call.1} parent=1 // pred_region
      %s30 = ssub.s32 512, 512
      %31 = vsyncadd [#allocation6], %s30
      %s32 = sshll.u32 [#allocation5], 4
      %s33 = int_to_ptr.vmem [resolvable:$true] %s32
      %38 = dma.hbm_to_vmem [thread:$0]  %s1, 512, %s33, [#allocation6], 128, 128, 8
    $region9: #{tpu_custom_call.1} parent=1 // pred_fallthru
      _
    // Predicated region
    $region10: #{tpu_custom_call.1} parent=1 // pred_check
      _
    $region11: #{tpu_custom_call.1} parent=1 // pred_check_branch
      %40 = sbr.rel (0) target = $region13
    $region12: #{tpu_custom_call.1} parent=1 // pred_region
      %s42 = ssub.s32 2048, 2048
      %43 = vsyncadd [#allocation6], %s42
      %s44 = sshll.u32 [#allocation7], 4
      %s45 = int_to_ptr.vmem [resolvable:$true] %s44
      %50 = dma.hbm_to_vmem [thread:$0]  %s2, 2048, %s45, [#allocation6], 128, 128, 8
    $region13: #{tpu_custom_call.1} parent=1 // pred_fallthru
      _
    // Predicated region
    $region14: #{tpu_custom_call.1} parent=1 // pred_check
      _
    $region15: #{tpu_custom_call.1} parent=1 // pred_check_branch
      %52 = sbr.rel (0) target = $region17
    $region16: #{tpu_custom_call.1} parent=1 // pred_region
      _
    $region17: #{tpu_custom_call.1} parent=1 // pred_fallthru
      _
    // Predicated region
    $region18: #{tpu_custom_call.1} parent=1 // pred_check
      _
    $region19: #{tpu_custom_call.1} parent=1 // pred_check_branch
      %54 = sbr.rel (0) target = $region21
    $region20: #{tpu_custom_call.1} parent=1 // pred_region
      %s56 = ssub.s32 2048, 2048
      %57 = vsyncadd [#allocation9], %s56
      %s58 = sshll.u32 [#allocation8], 4
      %s59 = int_to_ptr.vmem [resolvable:$true] %s58
      %64 = dma.hbm_to_vmem [thread:$0]  %s4, 2048, %s59, [#allocation9], 128, 128, 8
    $region21: #{tpu_custom_call.1} parent=1 // pred_fallthru
      _
    // Predicated region
    $region22: #{tpu_custom_call.1} parent=1 // pred_check
      _
    $region23: #{tpu_custom_call.1} parent=1 // pred_check_branch
      %66 = sbr.rel (0) target = $region25
    $region24: #{tpu_custom_call.1} parent=1 // pred_region
      _
    $region25: #{tpu_custom_call.1} parent=1 // pred_fallthru
      _
    // Predicated region
    $region26: #{tpu_custom_call.1} parent=1 // pred_check
      _
    $region27: #{tpu_custom_call.1} parent=1 // pred_check_branch
      %68 = sbr.rel (0) target = $region29
    $region28: #{tpu_custom_call.1} parent=1 // pred_region
      %s70 = ssub.s32 2048, 2048
      %71 = vsyncadd [#allocation9], %s70
      %s72 = sshll.u32 [#allocation10], 4
      %s73 = int_to_ptr.vmem [resolvable:$true] %s72
      %78 = dma.hbm_to_vmem [thread:$0]  %s6, 2048, %s73, [#allocation9], 128, 128, 8
    $region29: #{tpu_custom_call.1} parent=1 // pred_fallthru
      _
    // Predicated region
    $region30: #{tpu_custom_call.1} parent=1 // pred_check
      _
    $region31: #{tpu_custom_call.1} parent=1 // pred_check_branch
      %80 = sbr.rel (0) target = $region33
    $region32: #{tpu_custom_call.1} parent=1 // pred_region
      _
    $region33: #{tpu_custom_call.1} parent=1 // pred_fallthru
      _
    // Predicated region
    $region34: #{tpu_custom_call.1} parent=1 // pred_check
      _
    $region35: #{tpu_custom_call.1} parent=1 // pred_check_branch
      %82 = sbr.rel (0) target = $region37
    $region36: #{tpu_custom_call.1} parent=1 // pred_region
      %83 = dma.done [#allocation3], 128
    $region37: #{tpu_custom_call.1} parent=1 // pred_fallthru
      _
    // Predicated region
    $region38: #{tpu_custom_call.1} parent=1 // pred_check
      _
    $region39: #{tpu_custom_call.1} parent=1 // pred_check_branch
      %85 = sbr.rel (0) target = $region41
    $region40: #{tpu_custom_call.1} parent=1 // pred_region
      %86 = dma.done [#allocation6], 512
    $region41: #{tpu_custom_call.1} parent=1 // pred_fallthru
      _
    // Predicated region
    $region42: #{tpu_custom_call.1} parent=1 // pred_check
      _
    $region43: #{tpu_custom_call.1} parent=1 // pred_check_branch
      %88 = sbr.rel (0) target = $region45
    $region44: #{tpu_custom_call.1} parent=1 // pred_region
      %89 = dma.done [#allocation6], 2048
    $region45: #{tpu_custom_call.1} parent=1 // pred_fallthru
      _
    // Predicated region
    $region46: #{tpu_custom_call.1} parent=1 // pred_check
      _
    $region47: #{tpu_custom_call.1} parent=1 // pred_check_branch
      %91 = sbr.rel (0) target = $region49
    $region48: #{tpu_custom_call.1} parent=1 // pred_region
      %92 = dma.done [#allocation9], 2048
    $region49: #{tpu_custom_call.1} parent=1 // pred_fallthru
      _
    // Predicated region
    $region50: #{tpu_custom_call.1} parent=1 // pred_check
      _
    $region51: #{tpu_custom_call.1} parent=1 // pred_check_branch
      %94 = sbr.rel (0) target = $region53
    $region52: #{tpu_custom_call.1} parent=1 // pred_region
      %95 = dma.done [#allocation9], 2048
    $region53: #{tpu_custom_call.1} parent=1 // pred_fallthru
      _
    %v96 = vld [vmem:[#allocation2] sm:$0xff]
    %v97 = vld [vmem:[#allocation7] sm:$0xff]
    %v98 = vld [vmem:[#allocation7 + $0x8] sm:$0xff]
    %v99 = vld [vmem:[#allocation7 + $0x10] sm:$0xff]
    %v100 = vld [vmem:[#allocation7 + $0x18] sm:$0xff]
    %v101 = vld [vmem:[#allocation7 + $0x20] sm:$0xff]
    %v102 = vld [vmem:[#allocation7 + $0x28] sm:$0xff]
    %v103 = vld [vmem:[#allocation7 + $0x30] sm:$0xff]
    %v104 = vld [vmem:[#allocation7 + $0x38] sm:$0xff]
    %v105 = vld [vmem:[#allocation7 + $0x40] sm:$0xff]
    %v106 = vld [vmem:[#allocation7 + $0x48] sm:$0xff]
    %v107 = vld [vmem:[#allocation7 + $0x50] sm:$0xff]
    %v108 = vld [vmem:[#allocation7 + $0x58] sm:$0xff]
    %v109 = vld [vmem:[#allocation7 + $0x60] sm:$0xff]
    %v110 = vld [vmem:[#allocation7 + $0x68] sm:$0xff]
    %v111 = vld [vmem:[#allocation7 + $0x70] sm:$0xff]
    %v112 = vld [vmem:[#allocation7 + $0x78] sm:$0xff]
    %v113 = vld [vmem:[%s3] sm:$0x1]
    %v115 = vlaneseq
    %v116 = vshrl.u32 %v115, 7
    %v117 = vsub.s32 0, %v116
    %v118 = vrot.slane %v113, %v117
    %120 = vmatprep.subr.mxu0 0.0
    %121 = vmatpush1.msra.mxu0 %v97
    %122 = vmatprep.subr.mxu0 0.0
    %123 = vmatpush1.msra.mxu0 %v98
    %124 = vmatprep.subr.mxu0 0.0
    %125 = vmatpush1.msra.mxu0 %v99
    %126 = vmatprep.subr.mxu0 0.0
    %127 = vmatpush1.msra.mxu0 %v100
    %128 = vmatprep.subr.mxu0 0.0
    %129 = vmatpush1.msra.mxu0 %v101
    %130 = vmatprep.subr.mxu0 0.0
    %131 = vmatpush1.msra.mxu0 %v102
    %132 = vmatprep.subr.mxu0 0.0
    %133 = vmatpush1.msra.mxu0 %v103
    %134 = vmatprep.subr.mxu0 0.0
    %135 = vmatpush1.msra.mxu0 %v104
    %136 = vmatprep.subr.mxu0 0.0
    %137 = vmatpush1.msra.mxu0 %v105
    %138 = vmatprep.subr.mxu0 0.0
    %139 = vmatpush1.msra.mxu0 %v106
    %140 = vmatprep.subr.mxu0 0.0
    %141 = vmatpush1.msra.mxu0 %v107
    %142 = vmatprep.subr.mxu0 0.0
    %143 = vmatpush1.msra.mxu0 %v108
    %144 = vmatprep.subr.mxu0 0.0
    %145 = vmatpush1.msra.mxu0 %v109
    %146 = vmatprep.subr.mxu0 0.0
    %147 = vmatpush1.msra.mxu0 %v110
    %148 = vmatprep.subr.mxu0 0.0
    %149 = vmatpush1.msra.mxu0 %v111
    %150 = vmatprep.subr.mxu0 0.0
    %151 = vmatpush1.msra.mxu0 %v112
    %152 = vmatprep.subr.mxu0 0.0
    %153 = vmatpush1.msra.mxu0 0.0
    %154 = vmatprep.subr.mxu0 0.0
    %155 = vmatpush1.msra.mxu0 0.0
    %156 = vmatprep.subr.mxu0 0.0
    %157 = vmatpush1.msra.mxu0 0.0
    %158 = vmatprep.subr.mxu0 0.0
    %159 = vmatpush1.msra.mxu0 0.0
    %160 = vmatprep.subr.mxu0 0.0
    %161 = vmatpush1.msra.mxu0 0.0
    %162 = vmatprep.subr.mxu0 0.0
    %163 = vmatpush1.msra.mxu0 0.0
    %164 = vmatprep.subr.mxu0 0.0
    %165 = vmatpush1.msra.mxu0 0.0
    %166 = vmatprep.subr.mxu0 0.0
    %167 = vmatpush1.msra.mxu0 0.0
    %168 = vmatprep.subr.mxu0 0.0
    %169 = vmatpush1.msra.mxu0 0.0
    %170 = vmatprep.subr.mxu0 0.0
    %171 = vmatpush1.msra.mxu0 0.0
    %172 = vmatprep.subr.mxu0 0.0
    %173 = vmatpush1.msra.mxu0 0.0
    %174 = vmatprep.subr.mxu0 0.0
    %175 = vmatpush1.msra.mxu0 0.0
    %176 = vmatprep.subr.mxu0 0.0
    %177 = vmatpush1.msra.mxu0 0.0
    %178 = vmatprep.subr.mxu0 0.0
    %179 = vmatpush1.msra.mxu0 0.0
    %180 = vmatprep.subr.mxu0 0.0
    %181 = vmatpush1.msra.mxu0 0.0
    %182 = vmatprep.subr.mxu0 0.0
    %183 = vmatpush1.msra.mxu0 0.0
    %184 = vmatprep.mubr.f32.mxu0 0.0
    %185 = vmatmul.mubr.f32.gmra.mrb[0].mxu0 %v96
    %v186 = vpop.f32.mrb[0].mxu0
    %v187 = vadd.f32 %v118, %v186
    %v188 = vpop.f32.mrb[0].mxu0
    %189 = vdwg.mxu0
    %v190 = vld [vmem:[#allocation5] sm:$0xff]
    %v191 = vld [vmem:[#allocation5 + $0x8] sm:$0xff]
    %v192 = vld [vmem:[#allocation5 + $0x10] sm:$0xff]
    %v193 = vld [vmem:[#allocation5 + $0x18] sm:$0xff]
    %v194 = vld [vmem:[#allocation8] sm:$0xff]
    %v195 = vld [vmem:[#allocation8 + $0x8] sm:$0xff]
    %v196 = vld [vmem:[#allocation8 + $0x10] sm:$0xff]
    %v197 = vld [vmem:[#allocation8 + $0x18] sm:$0xff]
    %v198 = vld [vmem:[#allocation8 + $0x20] sm:$0xff]
    %v199 = vld [vmem:[#allocation8 + $0x28] sm:$0xff]
    %v200 = vld [vmem:[#allocation8 + $0x30] sm:$0xff]
    %v201 = vld [vmem:[#allocation8 + $0x38] sm:$0xff]
    %v202 = vld [vmem:[#allocation8 + $0x40] sm:$0xff]
    %v203 = vld [vmem:[#allocation8 + $0x48] sm:$0xff]
    %v204 = vld [vmem:[#allocation8 + $0x50] sm:$0xff]
    %v205 = vld [vmem:[#allocation8 + $0x58] sm:$0xff]
    %v206 = vld [vmem:[#allocation8 + $0x60] sm:$0xff]
    %v207 = vld [vmem:[#allocation8 + $0x68] sm:$0xff]
    %v208 = vld [vmem:[#allocation8 + $0x70] sm:$0xff]
    %v209 = vld [vmem:[#allocation8 + $0x78] sm:$0xff]
    %v210 = vld [vmem:[%s5] sm:$0x1]
    %v212 = vlaneseq
    %v213 = vshrl.u32 %v212, 7
    %v214 = vsub.s32 0, %v213
    %v215 = vrot.slane %v210, %v214
    %217 = vmatprep.subr.mxu0 0.0
    %218 = vmatpush1.msra.mxu0 %v194
    %219 = vmatprep.subr.mxu0 0.0
    %220 = vmatpush1.msra.mxu0 %v195
    %221 = vmatprep.subr.mxu0 0.0
    %222 = vmatpush1.msra.mxu0 %v196
    %223 = vmatprep.subr.mxu0 0.0
    %224 = vmatpush1.msra.mxu0 %v197
    %225 = vmatprep.subr.mxu0 0.0
    %226 = vmatpush1.msra.mxu0 %v198
    %227 = vmatprep.subr.mxu0 0.0
    %228 = vmatpush1.msra.mxu0 %v199
    %229 = vmatprep.subr.mxu0 0.0
    %230 = vmatpush1.msra.mxu0 %v200
    %231 = vmatprep.subr.mxu0 0.0
    %232 = vmatpush1.msra.mxu0 %v201
    %233 = vmatprep.subr.mxu0 0.0
    %234 = vmatpush1.msra.mxu0 %v202
    %235 = vmatprep.subr.mxu0 0.0
    %236 = vmatpush1.msra.mxu0 %v203
    %237 = vmatprep.subr.mxu0 0.0
    %238 = vmatpush1.msra.mxu0 %v204
    %239 = vmatprep.subr.mxu0 0.0
    %240 = vmatpush1.msra.mxu0 %v205
    %241 = vmatprep.subr.mxu0 0.0
    %242 = vmatpush1.msra.mxu0 %v206
    %243 = vmatprep.subr.mxu0 0.0
    %244 = vmatpush1.msra.mxu0 %v207
    %245 = vmatprep.subr.mxu0 0.0
    %246 = vmatpush1.msra.mxu0 %v208
    %247 = vmatprep.subr.mxu0 0.0
    %248 = vmatpush1.msra.mxu0 %v209
    %249 = vmatprep.subr.mxu0 0.0
    %250 = vmatpush1.msra.mxu0 0.0
    %251 = vmatprep.subr.mxu0 0.0
    %252 = vmatpush1.msra.mxu0 0.0
    %253 = vmatprep.subr.mxu0 0.0
    %254 = vmatpush1.msra.mxu0 0.0
    %255 = vmatprep.subr.mxu0 0.0
    %256 = vmatpush1.msra.mxu0 0.0
    %257 = vmatprep.subr.mxu0 0.0
    %258 = vmatpush1.msra.mxu0 0.0
    %259 = vmatprep.subr.mxu0 0.0
    %260 = vmatpush1.msra.mxu0 0.0
    %261 = vmatprep.subr.mxu0 0.0
    %262 = vmatpush1.msra.mxu0 0.0
    %263 = vmatprep.subr.mxu0 0.0
    %264 = vmatpush1.msra.mxu0 0.0
    %265 = vmatprep.subr.mxu0 0.0
    %266 = vmatpush1.msra.mxu0 0.0
    %267 = vmatprep.subr.mxu0 0.0
    %268 = vmatpush1.msra.mxu0 0.0
    %269 = vmatprep.subr.mxu0 0.0
    %270 = vmatpush1.msra.mxu0 0.0
    %271 = vmatprep.subr.mxu0 0.0
    %272 = vmatpush1.msra.mxu0 0.0
    %273 = vmatprep.subr.mxu0 0.0
    %274 = vmatpush1.msra.mxu0 0.0
    %275 = vmatprep.subr.mxu0 0.0
    %276 = vmatpush1.msra.mxu0 0.0
    %277 = vmatprep.subr.mxu0 0.0
    %278 = vmatpush1.msra.mxu0 0.0
    %279 = vmatprep.subr.mxu0 0.0
    %280 = vmatpush1.msra.mxu0 0.0
    %281 = vmatprep.mubr.f32.mxu0 0.0
    %282 = vmatmul.mubr.f32.gmra.mrb[0].mxu0 %v190
    %v283 = vpop.f32.mrb[0].mxu0
    %v284 = vadd.f32 %v215, %v283
    %v285 = vpop.f32.mrb[0].mxu0
    %286 = vmatprep.mubr.f32.mxu0 0.0
    %287 = vmatmul.mubr.f32.gmra.mrb[0].mxu0 %v191
    %v288 = vpop.f32.mrb[0].mxu0
    %v289 = vadd.f32 %v215, %v288
    %v290 = vpop.f32.mrb[0].mxu0
    %291 = vmatprep.mubr.f32.mxu0 0.0
    %292 = vmatmul.mubr.f32.gmra.mrb[0].mxu0 %v192
    %v293 = vpop.f32.mrb[0].mxu0
    %v294 = vadd.f32 %v215, %v293
    %v295 = vpop.f32.mrb[0].mxu0
    %296 = vmatprep.mubr.f32.mxu0 0.0
    %297 = vmatmul.mubr.f32.gmra.mrb[0].mxu0 %v193
    %v298 = vpop.f32.mrb[0].mxu0
    %v299 = vadd.f32 %v215, %v298
    %v300 = vpop.f32.mrb[0].mxu0
    %301 = vdwg.mxu0
    %v302 = vld [vmem:[#allocation10] sm:$0xff]
    %v303 = vld [vmem:[#allocation10 + $0x8] sm:$0xff]
    %v304 = vld [vmem:[#allocation10 + $0x10] sm:$0xff]
    %v305 = vld [vmem:[#allocation10 + $0x18] sm:$0xff]
    %v306 = vld [vmem:[#allocation10 + $0x20] sm:$0xff]
    %v307 = vld [vmem:[#allocation10 + $0x28] sm:$0xff]
    %v308 = vld [vmem:[#allocation10 + $0x30] sm:$0xff]
    %v309 = vld [vmem:[#allocation10 + $0x38] sm:$0xff]
    %v310 = vld [vmem:[#allocation10 + $0x40] sm:$0xff]
    %v311 = vld [vmem:[#allocation10 + $0x48] sm:$0xff]
    %v312 = vld [vmem:[#allocation10 + $0x50] sm:$0xff]
    %v313 = vld [vmem:[#allocation10 + $0x58] sm:$0xff]
    %v314 = vld [vmem:[#allocation10 + $0x60] sm:$0xff]
    %v315 = vld [vmem:[#allocation10 + $0x68] sm:$0xff]
    %v316 = vld [vmem:[#allocation10 + $0x70] sm:$0xff]
    %v317 = vld [vmem:[#allocation10 + $0x78] sm:$0xff]
    %v318 = vld [vmem:[%s7] sm:$0x1]
    %v320 = vlaneseq
    %v321 = vshrl.u32 %v320, 7
    %v322 = vsub.s32 0, %v321
    %v323 = vrot.slane %v318, %v322
    %325 = vmatprep.subr.mxu0 0.0
    %326 = vmatpush1.msra.mxu0 %v302
    %327 = vmatprep.subr.mxu0 0.0
    %328 = vmatpush1.msra.mxu0 %v303
    %329 = vmatprep.subr.mxu0 0.0
    %330 = vmatpush1.msra.mxu0 %v304
    %331 = vmatprep.subr.mxu0 0.0
    %332 = vmatpush1.msra.mxu0 %v305
    %333 = vmatprep.subr.mxu0 0.0
    %334 = vmatpush1.msra.mxu0 %v306
    %335 = vmatprep.subr.mxu0 0.0
    %336 = vmatpush1.msra.mxu0 %v307
    %337 = vmatprep.subr.mxu0 0.0
    %338 = vmatpush1.msra.mxu0 %v308
    %339 = vmatprep.subr.mxu0 0.0
    %340 = vmatpush1.msra.mxu0 %v309
    %341 = vmatprep.subr.mxu0 0.0
    %342 = vmatpush1.msra.mxu0 %v310
    %343 = vmatprep.subr.mxu0 0.0
    %344 = vmatpush1.msra.mxu0 %v311
    %345 = vmatprep.subr.mxu0 0.0
    %346 = vmatpush1.msra.mxu0 %v312
    %347 = vmatprep.subr.mxu0 0.0
    %348 = vmatpush1.msra.mxu0 %v313
    %349 = vmatprep.subr.mxu0 0.0
    %350 = vmatpush1.msra.mxu0 %v314
    %351 = vmatprep.subr.mxu0 0.0
    %352 = vmatpush1.msra.mxu0 %v315
    %353 = vmatprep.subr.mxu0 0.0
    %354 = vmatpush1.msra.mxu0 %v316
    %355 = vmatprep.subr.mxu0 0.0
    %356 = vmatpush1.msra.mxu0 %v317
    %357 = vmatprep.subr.mxu0 0.0
    %358 = vmatpush1.msra.mxu0 0.0
    %359 = vmatprep.subr.mxu0 0.0
    %360 = vmatpush1.msra.mxu0 0.0
    %361 = vmatprep.subr.mxu0 0.0
    %362 = vmatpush1.msra.mxu0 0.0
    %363 = vmatprep.subr.mxu0 0.0
    %364 = vmatpush1.msra.mxu0 0.0
    %365 = vmatprep.subr.mxu0 0.0
    %366 = vmatpush1.msra.mxu0 0.0
    %367 = vmatprep.subr.mxu0 0.0
    %368 = vmatpush1.msra.mxu0 0.0
    %369 = vmatprep.subr.mxu0 0.0
    %370 = vmatpush1.msra.mxu0 0.0
    %371 = vmatprep.subr.mxu0 0.0
    %372 = vmatpush1.msra.mxu0 0.0
    %373 = vmatprep.subr.mxu0 0.0
    %374 = vmatpush1.msra.mxu0 0.0
    %375 = vmatprep.subr.mxu0 0.0
    %376 = vmatpush1.msra.mxu0 0.0
    %377 = vmatprep.subr.mxu0 0.0
    %378 = vmatpush1.msra.mxu0 0.0
    %379 = vmatprep.subr.mxu0 0.0
    %380 = vmatpush1.msra.mxu0 0.0
    %381 = vmatprep.subr.mxu0 0.0
    %382 = vmatpush1.msra.mxu0 0.0
    %383 = vmatprep.subr.mxu0 0.0
    %384 = vmatpush1.msra.mxu0 0.0
    %385 = vmatprep.subr.mxu0 0.0
    %386 = vmatpush1.msra.mxu0 0.0
    %387 = vmatprep.subr.mxu0 0.0
    %388 = vmatpush1.msra.mxu0 0.0
    %389 = vmatprep.mubr.f32.mxu0 0.0
    %390 = vmatmul.mubr.f32.gmra.mrb[0].mxu0 %v190
    %v391 = vpop.f32.mrb[0].mxu0
    %v392 = vadd.f32 %v323, %v391
    %v393 = vpop.f32.mrb[0].mxu0
    %394 = vmatprep.mubr.f32.mxu0 0.0
    %395 = vmatmul.mubr.f32.gmra.mrb[0].mxu0 %v191
    %v396 = vpop.f32.mrb[0].mxu0
    %v397 = vadd.f32 %v323, %v396
    %v398 = vpop.f32.mrb[0].mxu0
    %399 = vmatprep.mubr.f32.mxu0 0.0
    %400 = vmatmul.mubr.f32.gmra.mrb[0].mxu0 %v192
    %v401 = vpop.f32.mrb[0].mxu0
    %v402 = vadd.f32 %v323, %v401
    %v403 = vpop.f32.mrb[0].mxu0
    %404 = vmatprep.mubr.f32.mxu0 0.0
    %405 = vmatmul.mubr.f32.gmra.mrb[0].mxu0 %v193
    %v406 = vpop.f32.mrb[0].mxu0
    %v407 = vadd.f32 %v323, %v406
    %v408 = vpop.f32.mrb[0].mxu0
    %409 = vdwg.mxu0
    %410 = vmatprep.subr.mxu0 0.0
    %411 = vmatpush1.xpose.msra.mxu0 %v187
    %412 = vmatprep.subr.mxu0 0.0
    %413 = vmatpush1.xpose.msra.mxu0 0.0
    %414 = vmatprep.subr.mxu0 0.0
    %415 = vmatpush1.xpose.msra.mxu0 0.0
    %416 = vmatprep.subr.mxu0 0.0
    %417 = vmatpush1.xpose.msra.mxu0 0.0
    %418 = vmatprep.subr.mxu0 0.0
    %419 = vmatpush1.xpose.msra.mxu0 0.0
    %420 = vmatprep.subr.mxu0 0.0
    %421 = vmatpush1.xpose.msra.mxu0 0.0
    %422 = vmatprep.subr.mxu0 0.0
    %423 = vmatpush1.xpose.msra.mxu0 0.0
    %424 = vmatprep.subr.mxu0 0.0
    %425 = vmatpush1.xpose.msra.mxu0 0.0
    %426 = vmatprep.subr.mxu0 0.0
    %427 = vmatpush1.xpose.msra.mxu0 0.0
    %428 = vmatprep.subr.mxu0 0.0
    %429 = vmatpush1.xpose.msra.mxu0 0.0
    %430 = vmatprep.subr.mxu0 0.0
    %431 = vmatpush1.xpose.msra.mxu0 0.0
    %432 = vmatprep.subr.mxu0 0.0
    %433 = vmatpush1.xpose.msra.mxu0 0.0
    %434 = vmatprep.subr.mxu0 0.0
    %435 = vmatpush1.xpose.msra.mxu0 0.0
    %436 = vmatprep.subr.mxu0 0.0
    %437 = vmatpush1.xpose.msra.mxu0 0.0
    %438 = vmatprep.subr.mxu0 0.0
    %439 = vmatpush1.xpose.msra.mxu0 0.0
    %440 = vmatprep.subr.mxu0 0.0
    %441 = vmatpush1.xpose.msra.mxu0 0.0
    %442 = vmatprep.subr.mxu0 0.0
    %443 = vmatpush1.xpose.msra.mxu0 0.0
    %444 = vmatprep.subr.mxu0 0.0
    %445 = vmatpush1.xpose.msra.mxu0 0.0
    %446 = vmatprep.subr.mxu0 0.0
    %447 = vmatpush1.xpose.msra.mxu0 0.0
    %448 = vmatprep.subr.mxu0 0.0
    %449 = vmatpush1.xpose.msra.mxu0 0.0
    %450 = vmatprep.subr.mxu0 0.0
    %451 = vmatpush1.xpose.msra.mxu0 0.0
    %452 = vmatprep.subr.mxu0 0.0
    %453 = vmatpush1.xpose.msra.mxu0 0.0
    %454 = vmatprep.subr.mxu0 0.0
    %455 = vmatpush1.xpose.msra.mxu0 0.0
    %456 = vmatprep.subr.mxu0 0.0
    %457 = vmatpush1.xpose.msra.mxu0 0.0
    %458 = vmatprep.subr.mxu0 0.0
    %459 = vmatpush1.xpose.msra.mxu0 0.0
    %460 = vmatprep.subr.mxu0 0.0
    %461 = vmatpush1.xpose.msra.mxu0 0.0
    %462 = vmatprep.subr.mxu0 0.0
    %463 = vmatpush1.xpose.msra.mxu0 0.0
    %464 = vmatprep.subr.mxu0 0.0
    %465 = vmatpush1.xpose.msra.mxu0 0.0
    %466 = vmatprep.subr.mxu0 0.0
    %467 = vmatpush1.xpose.msra.mxu0 0.0
    %468 = vmatprep.subr.mxu0 0.0
    %469 = vmatpush1.xpose.msra.mxu0 0.0
    %470 = vmatprep.subr.mxu0 0.0
    %471 = vmatpush1.xpose.msra.mxu0 0.0
    %472 = vmatprep.subr.mxu0 0.0
    %473 = vmatpush1.xpose.msra.mxu0 0.0
    %474 = vmatprep.mubr.f32.mxu0 0.0
    %475 = vmatmul.mubr.f32.gmra.mrb[0].mxu0 %v284
    %v476 = vpop.f32.mrb[0].mxu0
    %v477 = vadd.f32 0.0, %v476
    %v478 = vpop.f32.mrb[0].mxu0
    %479 = vmatprep.mubr.f32.mxu0 0.0
    %480 = vmatmul.mubr.f32.gmra.mrb[0].mxu0 %v289
    %v481 = vpop.f32.mrb[0].mxu0
    %v482 = vadd.f32 0.0, %v481
    %v483 = vpop.f32.mrb[0].mxu0
    %484 = vmatprep.mubr.f32.mxu0 0.0
    %485 = vmatmul.mubr.f32.gmra.mrb[0].mxu0 %v294
    %v486 = vpop.f32.mrb[0].mxu0
    %v487 = vadd.f32 0.0, %v486
    %v488 = vpop.f32.mrb[0].mxu0
    %489 = vmatprep.mubr.f32.mxu0 0.0
    %490 = vmatmul.mubr.f32.gmra.mrb[0].mxu0 %v299
    %v491 = vpop.f32.mrb[0].mxu0
    %v492 = vadd.f32 0.0, %v491
    %v493 = vpop.f32.mrb[0].mxu0
    %494 = vdwg.mxu0
    %495 = vxpose.xlu0.b32.start [1/16] %v477, 128
    %496 = vxpose.xlu0.b32.cont [2/16] %v482, 128
    %497 = vxpose.xlu0.b32.cont [3/16] 0.0, 128
    %498 = vxpose.xlu0.b32.cont [4/16] 0.0, 128
    %499 = vxpose.xlu0.b32.cont [5/16] 0.0, 128
    %500 = vxpose.xlu0.b32.cont [6/16] 0.0, 128
    %501 = vxpose.xlu0.b32.cont [7/16] 0.0, 128
    %502 = vxpose.xlu0.b32.cont [8/16] 0.0, 128
    %503 = vxpose.xlu0.b32.cont [9/16] 0.0, 128
    %504 = vxpose.xlu0.b32.cont [10/16] 0.0, 128
    %505 = vxpose.xlu0.b32.cont [11/16] 0.0, 128
    %506 = vxpose.xlu0.b32.cont [12/16] 0.0, 128
    %507 = vxpose.xlu0.b32.cont [13/16] 0.0, 128
    %508 = vxpose.xlu0.b32.cont [14/16] 0.0, 128
    %509 = vxpose.xlu0.b32.cont [15/16] 0.0, 128
    %510 = vxpose.xlu0.b32.end [16/16] 0.0, 128
    %v511 = vpop.trf.xlu0
    %v512 = vpop.trf.xlu0
    %v513 = vpop.trf.xlu0
    %v514 = vpop.trf.xlu0
    %v515 = vpop.trf.xlu0
    %v516 = vpop.trf.xlu0
    %v517 = vpop.trf.xlu0
    %v518 = vpop.trf.xlu0
    %v519 = vpop.trf.xlu0
    %v520 = vpop.trf.xlu0
    %v521 = vpop.trf.xlu0
    %v522 = vpop.trf.xlu0
    %v523 = vpop.trf.xlu0
    %v524 = vpop.trf.xlu0
    %v525 = vpop.trf.xlu0
    %v526 = vpop.trf.xlu0
    %527 = vxpose.xlu0.b32.start [1/16] %v487, 128
    %528 = vxpose.xlu0.b32.cont [2/16] %v492, 128
    %529 = vxpose.xlu0.b32.cont [3/16] 0.0, 128
    %530 = vxpose.xlu0.b32.cont [4/16] 0.0, 128
    %531 = vxpose.xlu0.b32.cont [5/16] 0.0, 128
    %532 = vxpose.xlu0.b32.cont [6/16] 0.0, 128
    %533 = vxpose.xlu0.b32.cont [7/16] 0.0, 128
    %534 = vxpose.xlu0.b32.cont [8/16] 0.0, 128
    %535 = vxpose.xlu0.b32.cont [9/16] 0.0, 128
    %536 = vxpose.xlu0.b32.cont [10/16] 0.0, 128
    %537 = vxpose.xlu0.b32.cont [11/16] 0.0, 128
    %538 = vxpose.xlu0.b32.cont [12/16] 0.0, 128
    %539 = vxpose.xlu0.b32.cont [13/16] 0.0, 128
    %540 = vxpose.xlu0.b32.cont [14/16] 0.0, 128
    %541 = vxpose.xlu0.b32.cont [15/16] 0.0, 128
    %542 = vxpose.xlu0.b32.end [16/16] 0.0, 128
    %v543 = vpop.trf.xlu0
    %v544 = vpop.trf.xlu0
    %v545 = vpop.trf.xlu0
    %v546 = vpop.trf.xlu0
    %v547 = vpop.trf.xlu0
    %v548 = vpop.trf.xlu0
    %v549 = vpop.trf.xlu0
    %v550 = vpop.trf.xlu0
    %v551 = vpop.trf.xlu0
    %v552 = vpop.trf.xlu0
    %v553 = vpop.trf.xlu0
    %v554 = vpop.trf.xlu0
    %v555 = vpop.trf.xlu0
    %v556 = vpop.trf.xlu0
    %v557 = vpop.trf.xlu0
    %v558 = vpop.trf.xlu0
    %vm559 = vcmask 130048
    %v560 = vsel %vm559, %v511, -inf
    %561 = vmax.xlane.f32.xlu0 %v560
    %v562 = vpop.xlane.xlu0 %561
    %v563 = vsel %vm559, %v543, -inf
    %564 = vmax.xlane.f32.xlu0 %v563
    %v565 = vpop.xlane.xlu0 %564
    %v566 = vsub.f32 %v511, %v562
    %v567 = vsub.f32 %v543, %v565
    %v568 = vmul.f32 %v566, 1.442695
    %v569 = vpow.pop %v568
    %v570 = vmul.f32 %v567, 1.442695
    %v571 = vpow.pop %v570
    %v572 = vsel %vm559, %v569, 0.0
    %573 = vadd.xlane.f32.xlu0 %v572
    %v574 = vpop.xlane.xlu0 %573
    %v575 = vsel %vm559, %v571, 0.0
    %576 = vadd.xlane.f32.xlu0 %v575
    %v577 = vpop.xlane.xlu0 %576
    %v578 = vrcp.pop %v574
    %v579 = vrcp.pop %v577
    %v580 = vmul.f32 %v578, 0.17677669
    %v581 = vmul.f32 %v579, 0.17677669
    %v582 = vmul.f32 %v569, %v580
    %v583 = vmul.f32 %v571, %v581
    %v585 = vsel %vm559, %v582, 0
    %587 = vmatprep.subr.mxu0 0.0
    %588 = vmatpush1.msra.mxu0 %v392
    %589 = vmatprep.subr.mxu0 0.0
    %590 = vmatpush1.msra.mxu0 %v397
    %591 = vmatprep.subr.mxu0 0.0
    %592 = vmatpush1.msra.mxu0 0.0
    %593 = vmatprep.subr.mxu0 0.0
    %594 = vmatpush1.msra.mxu0 0.0
    %595 = vmatprep.subr.mxu0 0.0
    %596 = vmatpush1.msra.mxu0 0.0
    %597 = vmatprep.subr.mxu0 0.0
    %598 = vmatpush1.msra.mxu0 0.0
    %599 = vmatprep.subr.mxu0 0.0
    %600 = vmatpush1.msra.mxu0 0.0
    %601 = vmatprep.subr.mxu0 0.0
    %602 = vmatpush1.msra.mxu0 0.0
    %603 = vmatprep.subr.mxu0 0.0
    %604 = vmatpush1.msra.mxu0 0.0
    %605 = vmatprep.subr.mxu0 0.0
    %606 = vmatpush1.msra.mxu0 0.0
    %607 = vmatprep.subr.mxu0 0.0
    %608 = vmatpush1.msra.mxu0 0.0
    %609 = vmatprep.subr.mxu0 0.0
    %610 = vmatpush1.msra.mxu0 0.0
    %611 = vmatprep.subr.mxu0 0.0
    %612 = vmatpush1.msra.mxu0 0.0
    %613 = vmatprep.subr.mxu0 0.0
    %614 = vmatpush1.msra.mxu0 0.0
    %615 = vmatprep.subr.mxu0 0.0
    %616 = vmatpush1.msra.mxu0 0.0
    %617 = vmatprep.subr.mxu0 0.0
    %618 = vmatpush1.msra.mxu0 0.0
    %619 = vmatprep.subr.mxu0 0.0
    %620 = vmatpush1.msra.mxu0 0.0
    %621 = vmatprep.subr.mxu0 0.0
    %622 = vmatpush1.msra.mxu0 0.0
    %623 = vmatprep.subr.mxu0 0.0
    %624 = vmatpush1.msra.mxu0 0.0
    %625 = vmatprep.subr.mxu0 0.0
    %626 = vmatpush1.msra.mxu0 0.0
    %627 = vmatprep.subr.mxu0 0.0
    %628 = vmatpush1.msra.mxu0 0.0
    %629 = vmatprep.subr.mxu0 0.0
    %630 = vmatpush1.msra.mxu0 0.0
    %631 = vmatprep.subr.mxu0 0.0
    %632 = vmatpush1.msra.mxu0 0.0
    %633 = vmatprep.subr.mxu0 0.0
    %634 = vmatpush1.msra.mxu0 0.0
    %635 = vmatprep.subr.mxu0 0.0
    %636 = vmatpush1.msra.mxu0 0.0
    %637 = vmatprep.subr.mxu0 0.0
    %638 = vmatpush1.msra.mxu0 0.0
    %639 = vmatprep.subr.mxu0 0.0
    %640 = vmatpush1.msra.mxu0 0.0
    %641 = vmatprep.subr.mxu0 0.0
    %642 = vmatpush1.msra.mxu0 0.0
    %643 = vmatprep.subr.mxu0 0.0
    %644 = vmatpush1.msra.mxu0 0.0
    %645 = vmatprep.subr.mxu0 0.0
    %646 = vmatpush1.msra.mxu0 0.0
    %647 = vmatprep.subr.mxu0 0.0
    %648 = vmatpush1.msra.mxu0 0.0
    %649 = vmatprep.subr.mxu0 0.0
    %650 = vmatpush1.msra.mxu0 0.0
    %651 = vmatprep.mubr.f32.mxu0 0.0
    %652 = vmatmul.mubr.f32.gmra.mrb[0].mxu0 %v585
    %v653 = vpop.f32.mrb[0].mxu0
    %v654 = vadd.f32 0.0, %v653
    %v655 = vpop.f32.mrb[0].mxu0
    %656 = vdwg.mxu0
    %v658 = vsel %vm559, %v583, 0
    %660 = vmatprep.subr.mxu0 0.0
    %661 = vmatpush1.msra.mxu0 %v402
    %662 = vmatprep.subr.mxu0 0.0
    %663 = vmatpush1.msra.mxu0 %v407
    %664 = vmatprep.subr.mxu0 0.0
    %665 = vmatpush1.msra.mxu0 0.0
    %666 = vmatprep.subr.mxu0 0.0
    %667 = vmatpush1.msra.mxu0 0.0
    %668 = vmatprep.subr.mxu0 0.0
    %669 = vmatpush1.msra.mxu0 0.0
    %670 = vmatprep.subr.mxu0 0.0
    %671 = vmatpush1.msra.mxu0 0.0
    %672 = vmatprep.subr.mxu0 0.0
    %673 = vmatpush1.msra.mxu0 0.0
    %674 = vmatprep.subr.mxu0 0.0
    %675 = vmatpush1.msra.mxu0 0.0
    %676 = vmatprep.subr.mxu0 0.0
    %677 = vmatpush1.msra.mxu0 0.0
    %678 = vmatprep.subr.mxu0 0.0
    %679 = vmatpush1.msra.mxu0 0.0
    %680 = vmatprep.subr.mxu0 0.0
    %681 = vmatpush1.msra.mxu0 0.0
    %682 = vmatprep.subr.mxu0 0.0
    %683 = vmatpush1.msra.mxu0 0.0
    %684 = vmatprep.subr.mxu0 0.0
    %685 = vmatpush1.msra.mxu0 0.0
    %686 = vmatprep.subr.mxu0 0.0
    %687 = vmatpush1.msra.mxu0 0.0
    %688 = vmatprep.subr.mxu0 0.0
    %689 = vmatpush1.msra.mxu0 0.0
    %690 = vmatprep.subr.mxu0 0.0
    %691 = vmatpush1.msra.mxu0 0.0
    %692 = vmatprep.subr.mxu0 0.0
    %693 = vmatpush1.msra.mxu0 0.0
    %694 = vmatprep.subr.mxu0 0.0
    %695 = vmatpush1.msra.mxu0 0.0
    %696 = vmatprep.subr.mxu0 0.0
    %697 = vmatpush1.msra.mxu0 0.0
    %698 = vmatprep.subr.mxu0 0.0
    %699 = vmatpush1.msra.mxu0 0.0
    %700 = vmatprep.subr.mxu0 0.0
    %701 = vmatpush1.msra.mxu0 0.0
    %702 = vmatprep.subr.mxu0 0.0
    %703 = vmatpush1.msra.mxu0 0.0
    %704 = vmatprep.subr.mxu0 0.0
    %705 = vmatpush1.msra.mxu0 0.0
    %706 = vmatprep.subr.mxu0 0.0
    %707 = vmatpush1.msra.mxu0 0.0
    %708 = vmatprep.subr.mxu0 0.0
    %709 = vmatpush1.msra.mxu0 0.0
    %710 = vmatprep.subr.mxu0 0.0
    %711 = vmatpush1.msra.mxu0 0.0
    %712 = vmatprep.subr.mxu0 0.0
    %713 = vmatpush1.msra.mxu0 0.0
    %714 = vmatprep.subr.mxu0 0.0
    %715 = vmatpush1.msra.mxu0 0.0
    %716 = vmatprep.subr.mxu0 0.0
    %717 = vmatpush1.msra.mxu0 0.0
    %718 = vmatprep.subr.mxu0 0.0
    %719 = vmatpush1.msra.mxu0 0.0
    %720 = vmatprep.subr.mxu0 0.0
    %721 = vmatpush1.msra.mxu0 0.0
    %722 = vmatprep.subr.mxu0 0.0
    %723 = vmatpush1.msra.mxu0 0.0
    %724 = vmatprep.mubr.f32.mxu0 0.0
    %725 = vmatmul.mubr.f32.gmra.mrb[0].mxu0 %v658
    %v726 = vpop.f32.mrb[0].mxu0
    %v727 = vadd.f32 0.0, %v726
    %v728 = vpop.f32.mrb[0].mxu0
    %729 = vdwg.mxu0
    %730 = vst [vmem:[#allocation11] sm:$0xff] %v654
    %731 = vst [vmem:[#allocation11 + $0x8] sm:$0xff] %v727
    // Predicated region
    $region54: #{tpu_custom_call.1} parent=1 // pred_check
      _
    $region55: #{tpu_custom_call.1} parent=1 // pred_check_branch
      %733 = sbr.rel (0) target = $region57
    $region56: #{tpu_custom_call.1} parent=1 // pred_region
      %s735 = ssub.s32 256, 256
      %736 = vsyncadd [#allocation4], %s735
      %s737 = sshll.u32 [#allocation11], 4
      %s738 = int_to_ptr.vmem [resolvable:$true] %s737
      %743 = dma.vmem_to_hbm [thread:$0]  %s738, 256, %s8, [#allocation4], 128, 128, 8
    $region57: #{tpu_custom_call.1} parent=1 // pred_fallthru
      _
    // Predicated region
    $region58: #{tpu_custom_call.1} parent=1 // pred_check
      _
    $region59: #{tpu_custom_call.1} parent=1 // pred_check_branch
      %745 = sbr.rel (0) target = $region61
    $region60: #{tpu_custom_call.1} parent=1 // pred_region
      %746 = dma.done [#allocation4], 256
    $region61: #{tpu_custom_call.1} parent=1 // pred_fallthru
      _
    %747 = vsyncpa [#allocation3], 1
    %748 = vsyncpa [#allocation6], 1
    %749 = vsyncpa [#allocation9], 1
    %750 = vsyncpa [#allocation4], 1

</llo_original>
